<compile_context>
chip_gen: v5e
topology: v5e:2x2
jax: 0.10.0
libtpu: 0.0.40
codegen_flags: <defaults>
</compile_context>

<pallas_src>
import functools

import jax
import jax.numpy as jnp
from jax import lax
from jax.experimental import pallas as pl
from jax.experimental.pallas import tpu as pltpu

BN_EPS = 1e-5


def _mixed_op_kernel(x_ref, wa_ref, g1_ref, g2_ref, avgc_ref, vecs_ref,
                     o_ref, hpad_ref, *, H, W, C, block_n):
    """One grid step == `block_n` images in packed (block_n, H, W*C) layout."""
    WC = W * C
    Nb = block_n

    x = x_ref[...]                                    # (Nb, H, WC) f32
    x2d = x.reshape(Nb * H, WC)

    # Static validity masks (computed once per grid step; full shape so the
    # selects need no predicate broadcasting).
    lane = lax.broadcasted_iota(jnp.int32, (Nb, H, WC), 2)
    row = lax.broadcasted_iota(jnp.int32, (Nb, H, WC), 1)
    has_right = lane < (W - 1) * C        # column w+1 exists
    has_left = lane >= C                  # column w-1 exists
    has_down = row < H - 1                # row h+1 exists
    has_up = row >= 1                     # row h-1 exists

    # Zero only the two border rows of the H-shift scratch; the interior is
    # always fully overwritten before being read.
    zrow = jnp.zeros((Nb, 1, WC), jnp.float32)
    hpad_ref[:, 0:1, :] = zrow
    hpad_ref[:, H + 1:H + 2, :] = zrow

    # ---- pooling, W-pass: x[w +/- 1] via 0/1 shift matrices on the MXU ------
    sh = jnp.dot(x2d, wa_ref[...], preferred_element_type=jnp.float32)
    xr = sh[:, :WC].reshape(Nb, H, WC)                # x[h, w+1] (0 past edge)
    xl = sh[:, WC:].reshape(Nb, H, WC)                # x[h, w-1] (0 past edge)

    row_sum = x + xr + xl
    row_max = jnp.maximum(x, jnp.maximum(jnp.where(has_right, xr, x),
                                         jnp.where(has_left, xl, x)))

    # ---- pooling, H-pass (sum): zero-border scratch rows ---------------------
    hpad_ref[:, 1:H + 1, :] = row_sum
    sum_pool = row_sum + hpad_ref[:, 0:H, :] + hpad_ref[:, 2:H + 2, :]
    # avg_coef already contains 1/count (count_include_pad=False) * BN scale.
    avg_bn = sum_pool * avgc_ref[...] + vecs_ref[0]

    # ---- pooling, H-pass (max): exclude out-of-range rows with masks ---------
    hpad_ref[:, 1:H + 1, :] = row_max
    dn = jnp.where(has_down, hpad_ref[:, 2:H + 2, :], row_max)
    up = jnp.where(has_up, hpad_ref[:, 0:H, :], row_max)
    max_pool = jnp.maximum(row_max, jnp.maximum(dn, up))
    max_bn = max_pool * vecs_ref[1] + vecs_ref[2]

    # ---- sep_conv_3x3: ReLU -> (dw3x3 (+) pw1x1 (+) BN-scale) as matmuls -----
    # g = [G0 | G1 | G2]; Gi folds the W-taps of depthwise kernel row i, the
    # 1x1 pointwise conv and the BN scale into one (WC, WC) matrix.
    def sep_block(inp, g_ref, bn_shift_row):
        r2d = jnp.maximum(inp, 0.0).reshape(Nb * H, WC)
        s = jnp.dot(r2d, g_ref[...], preferred_element_type=jnp.float32)
        c0 = s[:, :WC].reshape(Nb, H, WC)             # contribution of row h-1
        c1 = s[:, WC:2 * WC].reshape(Nb, H, WC)       # contribution of row h
        c2 = s[:, 2 * WC:].reshape(Nb, H, WC)         # contribution of row h+1
        hpad_ref[:, 1:H + 1, :] = c0
        out = c1 + hpad_ref[:, 0:H, :]
        hpad_ref[:, 1:H + 1, :] = c2
        return out + hpad_ref[:, 2:H + 2, :] + bn_shift_row

    t = sep_block(x, g1_ref, vecs_ref[3])
    sep = sep_block(t, g2_ref, vecs_ref[4])

    # ---- skip_connect (identity) + sum over all ops (lane-dense store) -------
    o_ref[...] = x + avg_bn + max_bn + sep


def _choose_blocking(n):
    # Prefer >= 2 grid steps (one per v7x TensorCore) and cap the block size.
    grid_n = 2 if (n % 2 == 0 and n >= 2) else 1
    block_n = n // grid_n
    while block_n > 32 and block_n % 2 == 0:
        block_n //= 2
        grid_n *= 2
    return block_n, grid_n


@jax.jit
def mixed_op_forward(x_nchw, dw1, pw1, dw2, pw2, bn_scale, bn_shift):
    """x_nchw: (N, C, H, W); dw*: (C, 3, 3); pw*: (Cout, Cin);
    bn_scale/bn_shift: (4, C), rows = [avg_pool, max_pool, sep_conv1, sep_conv2]."""
    x_nchw = x_nchw.astype(jnp.float32)
    N, C, H, W = x_nchw.shape
    WC = W * C
    f32 = jnp.float32

    # Packed lane-dense input: (N, H, W*C) with W*C on the lane dimension.
    x_p = jnp.transpose(x_nchw, (0, 2, 3, 1)).reshape(N, H, WC)

    # ---- constant matrices for the W-direction linear work -------------------
    eye = jnp.eye(WC, dtype=f32)
    shift_r = jnp.eye(WC, k=-C, dtype=f32)     # y[w] = x[w+1] (0 at w=W-1)
    shift_l = jnp.eye(WC, k=C, dtype=f32)      # y[w] = x[w-1] (0 at w=0)
    wa = jnp.concatenate([shift_r, shift_l], axis=1)              # (WC, 2*WC)

    def build_g(dw, pw, scale):
        dwt = jnp.transpose(dw, (1, 2, 0)).astype(f32)            # (3, 3, C)
        pws = jnp.transpose(pw).astype(f32) * scale[None, :]      # (Cin, Cout)
        pw_big = jnp.kron(jnp.eye(W, dtype=f32), pws)             # (WC, WC)
        blocks = []
        for i in range(3):
            m_i = (shift_l * jnp.tile(dwt[i, 0], W)[None, :]
                   + eye * jnp.tile(dwt[i, 1], W)[None, :]
                   + shift_r * jnp.tile(dwt[i, 2], W)[None, :])
            blocks.append(m_i @ pw_big)
        return jnp.concatenate(blocks, axis=1)                    # (WC, 3*WC)

    g1 = build_g(dw1, pw1, bn_scale[2].astype(f32))
    g2 = build_g(dw2, pw2, bn_scale[3].astype(f32))

    # Per-pixel avg-pool scale: 1/valid_count (count_include_pad=False) * BN scale.
    ch = jnp.full((H,), 3.0, f32).at[0].set(2.0).at[H - 1].set(2.0)
    cw = jnp.full((W,), 3.0, f32).at[0].set(2.0).at[W - 1].set(2.0)
    inv_cnt = 1.0 / (ch[:, None] * cw[None, :])                   # (H, W)
    avg_coef = (inv_cnt[:, :, None]
                * bn_scale[0].astype(f32)[None, None, :]).reshape(H, WC)

    def tile_vec(v):
        return jnp.tile(v.astype(f32), (H, W))                    # (H, WC)

    vecs = jnp.stack([tile_vec(bn_shift[0]), tile_vec(bn_scale[1]),
                      tile_vec(bn_shift[1]), tile_vec(bn_shift[2]),
                      tile_vec(bn_shift[3])], axis=0)             # (5, H, WC)

    block_n, grid_n = _choose_blocking(N)
    kernel = functools.partial(_mixed_op_kernel, H=H, W=W, C=C, block_n=block_n)

    out_p = pl.pallas_call(
        kernel,
        out_shape=jax.ShapeDtypeStruct((N, H, WC), f32),
        grid=(grid_n,),
        in_specs=[
            pl.BlockSpec((block_n, H, WC), lambda i: (i, 0, 0)),   # x (packed)
            pl.BlockSpec((WC, 2 * WC), lambda i: (0, 0)),          # shift mats
            pl.BlockSpec((WC, 3 * WC), lambda i: (0, 0)),          # sep-conv 1
            pl.BlockSpec((WC, 3 * WC), lambda i: (0, 0)),          # sep-conv 2
            pl.BlockSpec((H, WC), lambda i: (0, 0)),               # avg coef
            pl.BlockSpec((5, H, WC), lambda i: (0, 0, 0)),         # BN vectors
        ],
        out_specs=pl.BlockSpec((block_n, H, WC), lambda i: (i, 0, 0)),
        scratch_shapes=[pltpu.VMEM((block_n, H + 2, WC), jnp.float32)],
        compiler_params=pltpu.CompilerParams(
            dimension_semantics=("parallel",)),
    )(x_p, wa, g1, g2, avg_coef, vecs)

    # TODO(synk): drop this unpack/transpose if the consumer takes the packed layout.
    return jnp.transpose(out_p.reshape(N, H, W, C), (0, 3, 1, 2))


def mixed_op_reference(x_nchw, dw1, pw1, dw2, pw2, bn_scale, bn_shift):
    """Pure-JAX reference (same semantics, XLA ops) for validation."""
    x = jnp.transpose(x_nchw.astype(jnp.float32), (0, 2, 3, 1))   # NHWC
    N, H, W, C = x.shape
    pad = [(0, 0), (1, 1), (1, 1), (0, 0)]
    hp = lax.Precision.HIGHEST

    win_sum = lax.reduce_window(x, 0.0, lax.add, (1, 3, 3, 1), (1, 1, 1, 1), pad)
    cnt = lax.reduce_window(jnp.ones((N, H, W, 1), x.dtype), 0.0, lax.add,
                            (1, 3, 3, 1), (1, 1, 1, 1), pad)
    avg = (win_sum / cnt) * bn_scale[0] + bn_shift[0]
    mx = lax.reduce_window(x, -jnp.inf, lax.max,
                           (1, 3, 3, 1), (1, 1, 1, 1), pad) * bn_scale[1] + bn_shift[1]

    def depthwise(inp, dw):
        wk = jnp.transpose(dw, (1, 2, 0))[:, :, None, :]          # (3,3,1,C) HWIO
        return lax.conv_general_dilated(
            inp, wk, (1, 1), [(1, 1), (1, 1)],
            dimension_numbers=('NHWC', 'HWIO', 'NHWC'),
            feature_group_count=C, precision=hp)

    def pointwise(inp, pw):
        wk = jnp.transpose(pw)[None, None, :, :]                  # (1,1,Cin,Cout)
        return lax.conv_general_dilated(
            inp, wk, (1, 1), [(0, 0), (0, 0)],
            dimension_numbers=('NHWC', 'HWIO', 'NHWC'), precision=hp)

    t = jnp.maximum(x, 0.0)
    t = pointwise(depthwise(t, dw1), pw1) * bn_scale[2] + bn_shift[2]
    t = jnp.maximum(t, 0.0)
    t = pointwise(depthwise(t, dw2), pw2) * bn_scale[3] + bn_shift[3]

    out = x + avg + mx + t
    return jnp.transpose(out, (0, 3, 1, 2))


if __name__ == "__main__":
    N, C, H, W = 8, 8, 16, 16            # W * C = 128 -> lane-dense packing
    key = jax.random.PRNGKey(0)
    k1, k2, k3, k4, k5 = jax.random.split(key, 5)

    x = jax.random.normal(k1, (N, C, H, W), jnp.float32)          # NCHW input
    # SepConv parameters (shapes from the module's __init__):
    #   depthwise 3x3 weight (C, 1, 3, 3) squeezed to (C, 3, 3),
    #   pointwise 1x1 weight (Cout, Cin).
    dw1 = 0.1 * jax.random.normal(k2, (C, 3, 3), jnp.float32)
    pw1 = 0.1 * jax.random.normal(k3, (C, C), jnp.float32)
    dw2 = 0.1 * jax.random.normal(k4, (C, 3, 3), jnp.float32)
    pw2 = 0.1 * jax.random.normal(k5, (C, C), jnp.float32)
    # 4 BatchNorm2d(C, affine=False) in eval mode: running_mean=0, running_var=1.
    bn_scale = jnp.full((4, C), 1.0 / jnp.sqrt(1.0 + BN_EPS), jnp.float32)
    bn_shift = jnp.zeros((4, C), jnp.float32)

    out = mixed_op_forward(x, dw1, pw1, dw2, pw2, bn_scale, bn_shift)
    out = jax.block_until_ready(out)

    ref = mixed_op_reference(x, dw1, pw1, dw2, pw2, bn_scale, bn_shift)
    assert out.shape == (N, C, H, W)
    assert jnp.allclose(out, ref, atol=5e-3, rtol=5e-3), "kernel != reference"
    print("KERNEL_OK")
</pallas_src>

<mosaic_0001>
module attributes {stable_mosaic.version = 11 : i64} {
  func.func @_mixed_op_kernel(%arg0: i32, %arg1: memref<4x16x128xf32, #tpu.memory_space<vmem>>, %arg2: memref<128x256xf32, #tpu.memory_space<vmem>>, %arg3: memref<128x384xf32, #tpu.memory_space<vmem>>, %arg4: memref<128x384xf32, #tpu.memory_space<vmem>>, %arg5: memref<16x128xf32, #tpu.memory_space<vmem>>, %arg6: memref<5x16x128xf32, #tpu.memory_space<vmem>>, %arg7: memref<4x16x128xf32, #tpu.memory_space<vmem>>, %arg8: memref<4x18x128xf32, #tpu.memory_space<vmem>>) attributes {dimension_semantics = [#tpu.dimension_semantics<parallel>], iteration_bounds = array<i64: 2>, scalar_prefetch = 0 : i64, scratch_operands = 1 : i64, tpu.core_type = #tpu.core_type<tc>, window_params = [{transform_indices = @transform_0, window_bounds = array<i64: 4, 16, 128>}, {pipeline_mode = #tpu.pipeline_mode<synchronous>, transform_indices = @transform_1, window_bounds = array<i64: 128, 256>}, {pipeline_mode = #tpu.pipeline_mode<synchronous>, transform_indices = @transform_2, window_bounds = array<i64: 128, 384>}, {pipeline_mode = #tpu.pipeline_mode<synchronous>, transform_indices = @transform_3, window_bounds = array<i64: 128, 384>}, {pipeline_mode = #tpu.pipeline_mode<synchronous>, transform_indices = @transform_4, window_bounds = array<i64: 16, 128>}, {pipeline_mode = #tpu.pipeline_mode<synchronous>, transform_indices = @transform_5, window_bounds = array<i64: 5, 16, 128>}, {transform_indices = @transform_6, window_bounds = array<i64: 4, 16, 128>}]} {
    %c0 = arith.constant 0 : index
    %c0_0 = arith.constant 0 : index
    %c0_1 = arith.constant 0 : index
    %0 = vector.load %arg1[%c0, %c0_0, %c0_1] : memref<4x16x128xf32, #tpu.memory_space<vmem>>, vector<4x16x128xf32>
    %1 = vector.shape_cast %0 : vector<4x16x128xf32> to vector<64x128xf32>
    %2 = tpu.iota {dimensions = array<i32: 2>} : vector<4x16x128xi32>
    %3 = tpu.iota {dimensions = array<i32: 1>} : vector<4x16x128xi32>
    %c120_i32 = arith.constant 120 : i32
    %4 = vector.broadcast %c120_i32 : i32 to vector<4x16x128xi32>
    %5 = arith.cmpi slt, %2, %4 : vector<4x16x128xi32>
    %c8_i32 = arith.constant 8 : i32
    %6 = vector.broadcast %c8_i32 : i32 to vector<4x16x128xi32>
    %7 = arith.cmpi sge, %2, %6 : vector<4x16x128xi32>
    %c15_i32 = arith.constant 15 : i32
    %8 = vector.broadcast %c15_i32 : i32 to vector<4x16x128xi32>
    %9 = arith.cmpi slt, %3, %8 : vector<4x16x128xi32>
    %c1_i32 = arith.constant 1 : i32
    %10 = vector.broadcast %c1_i32 : i32 to vector<4x16x128xi32>
    %11 = arith.cmpi sge, %3, %10 : vector<4x16x128xi32>
    %cst = arith.constant 0.000000e+00 : f32
    %12 = vector.broadcast %cst : f32 to vector<4x1x128xf32>
    %c0_2 = arith.constant 0 : index
    %c0_3 = arith.constant 0 : index
    %c0_4 = arith.constant 0 : index
    %13 = vector.load %arg8[%c0_2, %c0_3, %c0_4] : memref<4x18x128xf32, #tpu.memory_space<vmem>>, vector<4x1x128xf32>
    tpu.vector_store %arg8[%c0_2, %c0_3, %c0_4], %12 {strides = array<i32>} : memref<4x18x128xf32, #tpu.memory_space<vmem>>, vector<4x1x128xf32>,
    %c0_5 = arith.constant 0 : index
    %c17 = arith.constant 17 : index
    %c0_6 = arith.constant 0 : index
    %14 = vector.load %arg8[%c0_5, %c17, %c0_6] : memref<4x18x128xf32, #tpu.memory_space<vmem>>, vector<4x1x128xf32>
    tpu.vector_store %arg8[%c0_5, %c17, %c0_6], %12 {strides = array<i32>} : memref<4x18x128xf32, #tpu.memory_space<vmem>>, vector<4x1x128xf32>,
    %c0_7 = arith.constant 0 : index
    %c0_8 = arith.constant 0 : index
    %15 = vector.load %arg2[%c0_7, %c0_8] : memref<128x256xf32, #tpu.memory_space<vmem>>, vector<128x256xf32>
    %cst_9 = arith.constant dense<0.000000e+00> : vector<64x256xf32>
    %16 = tpu.matmul %1, %15, %cst_9 {dimension_numbers = #tpu.dot_dimension_numbers<[1], [0], [0], [1], [0, 0, 1, 1], [], []>} : vector<64x128xf32>, vector<128x256xf32>, vector<64x256xf32> -> vector<64x256xf32>
    %17 = vector.extract_strided_slice %16 {offsets = [0, 0], sizes = [64, 128], strides = [1, 1]} : vector<64x256xf32> to vector<64x128xf32>
    %18 = vector.shape_cast %17 : vector<64x128xf32> to vector<4x16x128xf32>
    %19 = vector.extract_strided_slice %16 {offsets = [0, 128], sizes = [64, 128], strides = [1, 1]} : vector<64x256xf32> to vector<64x128xf32>
    %20 = vector.shape_cast %19 : vector<64x128xf32> to vector<4x16x128xf32>
    %21 = arith.addf %0, %18 : vector<4x16x128xf32>
    %22 = arith.addf %21, %20 : vector<4x16x128xf32>
    %23 = arith.select %5, %18, %0 : vector<4x16x128xi1>, vector<4x16x128xf32>
    %24 = arith.select %7, %20, %0 : vector<4x16x128xi1>, vector<4x16x128xf32>
    %25 = arith.maximumf %23, %24 : vector<4x16x128xf32>
    %26 = arith.maximumf %0, %25 : vector<4x16x128xf32>
    %c0_10 = arith.constant 0 : index
    %c1 = arith.constant 1 : index
    %c0_11 = arith.constant 0 : index
    %27 = vector.load %arg8[%c0_10, %c1, %c0_11] : memref<4x18x128xf32, #tpu.memory_space<vmem>>, vector<4x16x128xf32>
    tpu.vector_store %arg8[%c0_10, %c1, %c0_11], %22 {strides = array<i32>} : memref<4x18x128xf32, #tpu.memory_space<vmem>>, vector<4x16x128xf32>,
    %c0_12 = arith.constant 0 : index
    %c0_13 = arith.constant 0 : index
    %c0_14 = arith.constant 0 : index
    %28 = vector.load %arg8[%c0_12, %c0_13, %c0_14] : memref<4x18x128xf32, #tpu.memory_space<vmem>>, vector<4x16x128xf32>
    %29 = arith.addf %22, %28 : vector<4x16x128xf32>
    %c0_15 = arith.constant 0 : index
    %c2 = arith.constant 2 : index
    %c0_16 = arith.constant 0 : index
    %30 = vector.load %arg8[%c0_15, %c2, %c0_16] : memref<4x18x128xf32, #tpu.memory_space<vmem>>, vector<4x16x128xf32>
    %31 = arith.addf %29, %30 : vector<4x16x128xf32>
    %c0_17 = arith.constant 0 : index
    %c0_18 = arith.constant 0 : index
    %32 = vector.load %arg5[%c0_17, %c0_18] : memref<16x128xf32, #tpu.memory_space<vmem>>, vector<16x128xf32>
    %33 = vector.shape_cast %32 : vector<16x128xf32> to vector<1x16x128xf32>
    %34 = vector.broadcast %33 : vector<1x16x128xf32> to vector<4x16x128xf32>
    %35 = arith.mulf %31, %34 : vector<4x16x128xf32>
    %c0_19 = arith.constant 0 : index
    %c0_20 = arith.constant 0 : index
    %c0_21 = arith.constant 0 : index
    %36 = vector.load %arg6[%c0_19, %c0_20, %c0_21] : memref<5x16x128xf32, #tpu.memory_space<vmem>>, vector<1x16x128xf32>
    %37 = vector.shape_cast %36 : vector<1x16x128xf32> to vector<16x128xf32>
    %38 = vector.shape_cast %37 : vector<16x128xf32> to vector<1x16x128xf32>
    %39 = vector.broadcast %38 : vector<1x16x128xf32> to vector<4x16x128xf32>
    %40 = arith.addf %35, %39 : vector<4x16x128xf32>
    %c0_22 = arith.constant 0 : index
    %c1_23 = arith.constant 1 : index
    %c0_24 = arith.constant 0 : index
    %41 = vector.load %arg8[%c0_22, %c1_23, %c0_24] : memref<4x18x128xf32, #tpu.memory_space<vmem>>, vector<4x16x128xf32>
    tpu.vector_store %arg8[%c0_22, %c1_23, %c0_24], %26 {strides = array<i32>} : memref<4x18x128xf32, #tpu.memory_space<vmem>>, vector<4x16x128xf32>,
    %c0_25 = arith.constant 0 : index
    %c2_26 = arith.constant 2 : index
    %c0_27 = arith.constant 0 : index
    %42 = vector.load %arg8[%c0_25, %c2_26, %c0_27] : memref<4x18x128xf32, #tpu.memory_space<vmem>>, vector<4x16x128xf32>
    %43 = arith.select %9, %42, %26 : vector<4x16x128xi1>, vector<4x16x128xf32>
    %c0_28 = arith.constant 0 : index
    %c0_29 = arith.constant 0 : index
    %c0_30 = arith.constant 0 : index
    %44 = vector.load %arg8[%c0_28, %c0_29, %c0_30] : memref<4x18x128xf32, #tpu.memory_space<vmem>>, vector<4x16x128xf32>
    %45 = arith.select %11, %44, %26 : vector<4x16x128xi1>, vector<4x16x128xf32>
    %46 = arith.maximumf %43, %45 : vector<4x16x128xf32>
    %47 = arith.maximumf %26, %46 : vector<4x16x128xf32>
    %c1_31 = arith.constant 1 : index
    %c0_32 = arith.constant 0 : index
    %c0_33 = arith.constant 0 : index
    %48 = vector.load %arg6[%c1_31, %c0_32, %c0_33] : memref<5x16x128xf32, #tpu.memory_space<vmem>>, vector<1x16x128xf32>
    %49 = vector.shape_cast %48 : vector<1x16x128xf32> to vector<16x128xf32>
    %50 = vector.shape_cast %49 : vector<16x128xf32> to vector<1x16x128xf32>
    %51 = vector.broadcast %50 : vector<1x16x128xf32> to vector<4x16x128xf32>
    %52 = arith.mulf %47, %51 : vector<4x16x128xf32>
    %c2_34 = arith.constant 2 : index
    %c0_35 = arith.constant 0 : index
    %c0_36 = arith.constant 0 : index
    %53 = vector.load %arg6[%c2_34, %c0_35, %c0_36] : memref<5x16x128xf32, #tpu.memory_space<vmem>>, vector<1x16x128xf32>
    %54 = vector.shape_cast %53 : vector<1x16x128xf32> to vector<16x128xf32>
    %55 = vector.shape_cast %54 : vector<16x128xf32> to vector<1x16x128xf32>
    %56 = vector.broadcast %55 : vector<1x16x128xf32> to vector<4x16x128xf32>
    %57 = arith.addf %52, %56 : vector<4x16x128xf32>
    %c3 = arith.constant 3 : index
    %c0_37 = arith.constant 0 : index
    %c0_38 = arith.constant 0 : index
    %58 = vector.load %arg6[%c3, %c0_37, %c0_38] : memref<5x16x128xf32, #tpu.memory_space<vmem>>, vector<1x16x128xf32>
    %59 = vector.shape_cast %58 : vector<1x16x128xf32> to vector<16x128xf32>
    %cst_39 = arith.constant 0.000000e+00 : f32
    %60 = vector.broadcast %cst_39 : f32 to vector<4x16x128xf32>
    %61 = arith.maximumf %0, %60 : vector<4x16x128xf32>
    %62 = vector.shape_cast %61 : vector<4x16x128xf32> to vector<64x128xf32>
    %c0_40 = arith.constant 0 : index
    %c0_41 = arith.constant 0 : index
    %63 = vector.load %arg3[%c0_40, %c0_41] : memref<128x384xf32, #tpu.memory_space<vmem>>, vector<128x384xf32>
    %cst_42 = arith.constant dense<0.000000e+00> : vector<64x384xf32>
    %64 = tpu.matmul %62, %63, %cst_42 {dimension_numbers = #tpu.dot_dimension_numbers<[1], [0], [0], [1], [0, 0, 1, 1], [], []>} : vector<64x128xf32>, vector<128x384xf32>, vector<64x384xf32> -> vector<64x384xf32>
    %65 = vector.extract_strided_slice %64 {offsets = [0, 0], sizes = [64, 128], strides = [1, 1]} : vector<64x384xf32> to vector<64x128xf32>
    %66 = vector.shape_cast %65 : vector<64x128xf32> to vector<4x16x128xf32>
    %67 = vector.extract_strided_slice %64 {offsets = [0, 128], sizes = [64, 128], strides = [1, 1]} : vector<64x384xf32> to vector<64x128xf32>
    %68 = vector.shape_cast %67 : vector<64x128xf32> to vector<4x16x128xf32>
    %69 = vector.extract_strided_slice %64 {offsets = [0, 256], sizes = [64, 128], strides = [1, 1]} : vector<64x384xf32> to vector<64x128xf32>
    %70 = vector.shape_cast %69 : vector<64x128xf32> to vector<4x16x128xf32>
    %c0_43 = arith.constant 0 : index
    %c1_44 = arith.constant 1 : index
    %c0_45 = arith.constant 0 : index
    %71 = vector.load %arg8[%c0_43, %c1_44, %c0_45] : memref<4x18x128xf32, #tpu.memory_space<vmem>>, vector<4x16x128xf32>
    tpu.vector_store %arg8[%c0_43, %c1_44, %c0_45], %66 {strides = array<i32>} : memref<4x18x128xf32, #tpu.memory_space<vmem>>, vector<4x16x128xf32>,
    %c0_46 = arith.constant 0 : index
    %c0_47 = arith.constant 0 : index
    %c0_48 = arith.constant 0 : index
    %72 = vector.load %arg8[%c0_46, %c0_47, %c0_48] : memref<4x18x128xf32, #tpu.memory_space<vmem>>, vector<4x16x128xf32>
    %73 = arith.addf %68, %72 : vector<4x16x128xf32>
    %c0_49 = arith.constant 0 : index
    %c1_50 = arith.constant 1 : index
    %c0_51 = arith.constant 0 : index
    %74 = vector.load %arg8[%c0_49, %c1_50, %c0_51] : memref<4x18x128xf32, #tpu.memory_space<vmem>>, vector<4x16x128xf32>
    tpu.vector_store %arg8[%c0_49, %c1_50, %c0_51], %70 {strides = array<i32>} : memref<4x18x128xf32, #tpu.memory_space<vmem>>, vector<4x16x128xf32>,
    %c0_52 = arith.constant 0 : index
    %c2_53 = arith.constant 2 : index
    %c0_54 = arith.constant 0 : index
    %75 = vector.load %arg8[%c0_52, %c2_53, %c0_54] : memref<4x18x128xf32, #tpu.memory_space<vmem>>, vector<4x16x128xf32>
    %76 = arith.addf %73, %75 : vector<4x16x128xf32>
    %77 = vector.shape_cast %59 : vector<16x128xf32> to vector<1x16x128xf32>
    %78 = vector.broadcast %77 : vector<1x16x128xf32> to vector<4x16x128xf32>
    %79 = arith.addf %76, %78 : vector<4x16x128xf32>
    %c4 = arith.constant 4 : index
    %c0_55 = arith.constant 0 : index
    %c0_56 = arith.constant 0 : index
    %80 = vector.load %arg6[%c4, %c0_55, %c0_56] : memref<5x16x128xf32, #tpu.memory_space<vmem>>, vector<1x16x128xf32>
    %81 = vector.shape_cast %80 : vector<1x16x128xf32> to vector<16x128xf32>
    %cst_57 = arith.constant 0.000000e+00 : f32
    %82 = vector.broadcast %cst_57 : f32 to vector<4x16x128xf32>
    %83 = arith.maximumf %79, %82 : vector<4x16x128xf32>
    %84 = vector.shape_cast %83 : vector<4x16x128xf32> to vector<64x128xf32>
    %c0_58 = arith.constant 0 : index
    %c0_59 = arith.constant 0 : index
    %85 = vector.load %arg4[%c0_58, %c0_59] : memref<128x384xf32, #tpu.memory_space<vmem>>, vector<128x384xf32>
    %cst_60 = arith.constant dense<0.000000e+00> : vector<64x384xf32>
    %86 = tpu.matmul %84, %85, %cst_60 {dimension_numbers = #tpu.dot_dimension_numbers<[1], [0], [0], [1], [0, 0, 1, 1], [], []>} : vector<64x128xf32>, vector<128x384xf32>, vector<64x384xf32> -> vector<64x384xf32>
    %87 = vector.extract_strided_slice %86 {offsets = [0, 0], sizes = [64, 128], strides = [1, 1]} : vector<64x384xf32> to vector<64x128xf32>
    %88 = vector.shape_cast %87 : vector<64x128xf32> to vector<4x16x128xf32>
    %89 = vector.extract_strided_slice %86 {offsets = [0, 128], sizes = [64, 128], strides = [1, 1]} : vector<64x384xf32> to vector<64x128xf32>
    %90 = vector.shape_cast %89 : vector<64x128xf32> to vector<4x16x128xf32>
    %91 = vector.extract_strided_slice %86 {offsets = [0, 256], sizes = [64, 128], strides = [1, 1]} : vector<64x384xf32> to vector<64x128xf32>
    %92 = vector.shape_cast %91 : vector<64x128xf32> to vector<4x16x128xf32>
    %c0_61 = arith.constant 0 : index
    %c1_62 = arith.constant 1 : index
    %c0_63 = arith.constant 0 : index
    %93 = vector.load %arg8[%c0_61, %c1_62, %c0_63] : memref<4x18x128xf32, #tpu.memory_space<vmem>>, vector<4x16x128xf32>
    tpu.vector_store %arg8[%c0_61, %c1_62, %c0_63], %88 {strides = array<i32>} : memref<4x18x128xf32, #tpu.memory_space<vmem>>, vector<4x16x128xf32>,
    %c0_64 = arith.constant 0 : index
    %c0_65 = arith.constant 0 : index
    %c0_66 = arith.constant 0 : index
    %94 = vector.load %arg8[%c0_64, %c0_65, %c0_66] : memref<4x18x128xf32, #tpu.memory_space<vmem>>, vector<4x16x128xf32>
    %95 = arith.addf %90, %94 : vector<4x16x128xf32>
    %c0_67 = arith.constant 0 : index
    %c1_68 = arith.constant 1 : index
    %c0_69 = arith.constant 0 : index
    %96 = vector.load %arg8[%c0_67, %c1_68, %c0_69] : memref<4x18x128xf32, #tpu.memory_space<vmem>>, vector<4x16x128xf32>
    tpu.vector_store %arg8[%c0_67, %c1_68, %c0_69], %92 {strides = array<i32>} : memref<4x18x128xf32, #tpu.memory_space<vmem>>, vector<4x16x128xf32>,
    %c0_70 = arith.constant 0 : index
    %c2_71 = arith.constant 2 : index
    %c0_72 = arith.constant 0 : index
    %97 = vector.load %arg8[%c0_70, %c2_71, %c0_72] : memref<4x18x128xf32, #tpu.memory_space<vmem>>, vector<4x16x128xf32>
    %98 = arith.addf %95, %97 : vector<4x16x128xf32>
    %99 = vector.shape_cast %81 : vector<16x128xf32> to vector<1x16x128xf32>
    %100 = vector.broadcast %99 : vector<1x16x128xf32> to vector<4x16x128xf32>
    %101 = arith.addf %98, %100 : vector<4x16x128xf32>
    %102 = arith.addf %0, %40 : vector<4x16x128xf32>
    %103 = arith.addf %102, %57 : vector<4x16x128xf32>
    %104 = arith.addf %103, %101 : vector<4x16x128xf32>
    %c0_73 = arith.constant 0 : index
    %c0_74 = arith.constant 0 : index
    %c0_75 = arith.constant 0 : index
    %105 = vector.load %arg7[%c0_73, %c0_74, %c0_75] : memref<4x16x128xf32, #tpu.memory_space<vmem>>, vector<4x16x128xf32>
    tpu.vector_store %arg7[%c0_73, %c0_74, %c0_75], %104 {strides = array<i32>} : memref<4x16x128xf32, #tpu.memory_space<vmem>>, vector<4x16x128xf32>,
    return
  }
  func.func @transform_0(%arg0: i32) -> (i32, i32, i32) {
    %c0_i32 = arith.constant 0 : i32
    %c0_i32_0 = arith.constant 0 : i32
    %c0_i32_1 = arith.constant 0 : i32
    return %arg0, %c0_i32, %c0_i32_0 : i32, i32, i32
  }
  func.func @transform_1(%arg0: i32) -> (i32, i32) {
    %c0_i32 = arith.constant 0 : i32
    %c0_i32_0 = arith.constant 0 : i32
    %c0_i32_1 = arith.constant 0 : i32
    return %c0_i32, %c0_i32_0 : i32, i32
  }
  func.func @transform_2(%arg0: i32) -> (i32, i32) {
    %c0_i32 = arith.constant 0 : i32
    %c0_i32_0 = arith.constant 0 : i32
    %c0_i32_1 = arith.constant 0 : i32
    return %c0_i32, %c0_i32_0 : i32, i32
  }
  func.func @transform_3(%arg0: i32) -> (i32, i32) {
    %c0_i32 = arith.constant 0 : i32
    %c0_i32_0 = arith.constant 0 : i32
    %c0_i32_1 = arith.constant 0 : i32
    return %c0_i32, %c0_i32_0 : i32, i32
  }
  func.func @transform_4(%arg0: i32) -> (i32, i32) {
    %c0_i32 = arith.constant 0 : i32
    %c0_i32_0 = arith.constant 0 : i32
    %c0_i32_1 = arith.constant 0 : i32
    return %c0_i32, %c0_i32_0 : i32, i32
  }
  func.func @transform_5(%arg0: i32) -> (i32, i32, i32) {
    %c0_i32 = arith.constant 0 : i32
    %c0_i32_0 = arith.constant 0 : i32
    %c0_i32_1 = arith.constant 0 : i32
    %c0_i32_2 = arith.constant 0 : i32
    return %c0_i32, %c0_i32_0, %c0_i32_1 : i32, i32, i32
  }
  func.func @transform_6(%arg0: i32) -> (i32, i32, i32) {
    %c0_i32 = arith.constant 0 : i32
    %c0_i32_0 = arith.constant 0 : i32
    %c0_i32_1 = arith.constant 0 : i32
    return %arg0, %c0_i32, %c0_i32_0 : i32, i32, i32
  }
}

</mosaic_0001>

<llo_original>
// kernel: tile.130
$region0: #{tile.130}
  #allocation0 [shape = 's32[1]{0}', space=sflag, size = 0x4, scoped, tag = 'scoped memory for tile.130']
  %s0 = inlined_call_operand.vmem [shape: f32[8], index: 0, kind: input, shape index: {}]
  %s1 = inlined_call_operand.vmem [shape: f32[16,8], index: 1, kind: output, shape index: {}]
  // Predicated region
  $region2: #{tile.130} parent=0 // pred_check
    _
  $region3: #{tile.130} parent=0 // pred_check_branch
    %3 = sbr.rel (0) target = $region5
  $region4: #{tile.130} parent=0 // pred_region
    _
  $region5: #{tile.130} parent=0 // pred_fallthru
    _
  %v4 = vld [vmem:[%s0] ss:$0 sm:$0xff]
  %5 = vst [vmem:[%s1] sm:$0xff] %v4
  %s6 = scalar_lea.vmem %s1, 8
  %7 = vst [vmem:[%s6] sm:$0xff] %v4

// kernel: mul.153
$region0: #{mul.153}
  %s0 = inlined_call_operand.vmem [shape: f32[16,8], index: 0, kind: input, shape index: {}]
  %s1 = inlined_call_operand.vmem [shape: f32[128], index: 1, kind: output, shape index: {}]
  $region1: #{mul.153} parent=0
    #allocation0 [shape = 'u8[4096]{0}', space=vmem, size = 0x1000, scoped, tag = 'scoped mem for output reshape']
    %v2 = vld [vmem:[%s0] sm:$0x1]
    %vm3 = vcmask 64512
    %4 = vst.msk [vmem:[#allocation0] sm:$0x1] %vm3, %v2
    %s5 = scalar_lea.vmem %s0, 15
    %v6 = vld [vmem:[%s5] sm:$0x1]
    %7 = vrot.lane.b32.xlu0 %v6, 120
    %v8 = vpop.permute.xlu0 %7
    %vm9 = vcmask 1048512
    %10 = vst.msk [vmem:[#allocation0] sm:$0x1] %vm9, %v8
    %s11 = scalar_lea.vmem %s0, 14
    %v12 = vld [vmem:[%s11] sm:$0x1]
    %13 = vrot.lane.b32.xlu0 %v12, 112
    %v14 = vpop.permute.xlu0 %13
    %vm15 = vcmask 982912
    %16 = vst.msk [vmem:[#allocation0] sm:$0x1] %vm15, %v14
    %s17 = scalar_lea.vmem %s0, 13
    %v18 = vld [vmem:[%s17] sm:$0x1]
    %19 = vrot.lane.b32.xlu0 %v18, 104
    %v20 = vpop.permute.xlu0 %19
    %vm21 = vcmask 917312
    %22 = vst.msk [vmem:[#allocation0] sm:$0x1] %vm21, %v20
    %s23 = scalar_lea.vmem %s0, 12
    %v24 = vld [vmem:[%s23] sm:$0x1]
    %25 = vrot.lane.b32.xlu0 %v24, 96
    %v26 = vpop.permute.xlu0 %25
    %vm27 = vcmask 851712
    %28 = vst.msk [vmem:[#allocation0] sm:$0x1] %vm27, %v26
    %s29 = scalar_lea.vmem %s0, 11
    %v30 = vld [vmem:[%s29] sm:$0x1]
    %31 = vrot.lane.b32.xlu0 %v30, 88
    %v32 = vpop.permute.xlu0 %31
    %vm33 = vcmask 786112
    %34 = vst.msk [vmem:[#allocation0] sm:$0x1] %vm33, %v32
    %s35 = scalar_lea.vmem %s0, 10
    %v36 = vld [vmem:[%s35] sm:$0x1]
    %37 = vrot.lane.b32.xlu0 %v36, 80
    %v38 = vpop.permute.xlu0 %37
    %vm39 = vcmask 720512
    %40 = vst.msk [vmem:[#allocation0] sm:$0x1] %vm39, %v38
    %s41 = scalar_lea.vmem %s0, 9
    %v42 = vld [vmem:[%s41] sm:$0x1]
    %43 = vrot.lane.b32.xlu0 %v42, 72
    %v44 = vpop.permute.xlu0 %43
    %vm45 = vcmask 654912
    %46 = vst.msk [vmem:[#allocation0] sm:$0x1] %vm45, %v44
    %s47 = scalar_lea.vmem %s0, 8
    %v48 = vld [vmem:[%s47] sm:$0x1]
    %49 = vrot.lane.b32.xlu0 %v48, 64
    %v50 = vpop.permute.xlu0 %49
    %vm51 = vcmask 589312
    %52 = vst.msk [vmem:[#allocation0] sm:$0x1] %vm51, %v50
    %s53 = scalar_lea.vmem %s0, 7
    %v54 = vld [vmem:[%s53] sm:$0x1]
    %55 = vrot.lane.b32.xlu0 %v54, 56
    %v56 = vpop.permute.xlu0 %55
    %vm57 = vcmask 523712
    %58 = vst.msk [vmem:[#allocation0] sm:$0x1] %vm57, %v56
    %s59 = scalar_lea.vmem %s0, 6
    %v60 = vld [vmem:[%s59] sm:$0x1]
    %61 = vrot.lane.b32.xlu0 %v60, 48
    %v62 = vpop.permute.xlu0 %61
    %vm63 = vcmask 458112
    %64 = vst.msk [vmem:[#allocation0] sm:$0x1] %vm63, %v62
    %s65 = scalar_lea.vmem %s0, 5
    %v66 = vld [vmem:[%s65] sm:$0x1]
    %67 = vrot.lane.b32.xlu0 %v66, 40
    %v68 = vpop.permute.xlu0 %67
    %vm69 = vcmask 392512
    %70 = vst.msk [vmem:[#allocation0] sm:$0x1] %vm69, %v68
    %s71 = scalar_lea.vmem %s0, 4
    %v72 = vld [vmem:[%s71] sm:$0x1]
    %73 = vrot.lane.b32.xlu0 %v72, 32
    %v74 = vpop.permute.xlu0 %73
    %vm75 = vcmask 326912
    %76 = vst.msk [vmem:[#allocation0] sm:$0x1] %vm75, %v74
    %s77 = scalar_lea.vmem %s0, 3
    %v78 = vld [vmem:[%s77] sm:$0x1]
    %79 = vrot.lane.b32.xlu0 %v78, 24
    %v80 = vpop.permute.xlu0 %79
    %vm81 = vcmask 261312
    %82 = vst.msk [vmem:[#allocation0] sm:$0x1] %vm81, %v80
    %s83 = scalar_lea.vmem %s0, 2
    %v84 = vld [vmem:[%s83] sm:$0x1]
    %85 = vrot.lane.b32.xlu0 %v84, 16
    %v86 = vpop.permute.xlu0 %85
    %vm87 = vcmask 195712
    %88 = vst.msk [vmem:[#allocation0] sm:$0x1] %vm87, %v86
    %s89 = scalar_lea.vmem %s0, 1
    %v90 = vld [vmem:[%s89] sm:$0x1]
    %91 = vrot.lane.b32.xlu0 %v90, 8
    %v92 = vpop.permute.xlu0 %91
    %vm93 = vcmask 130112
    %94 = vst.msk [vmem:[#allocation0] sm:$0x1] %vm93, %v92
    %s96 = ssub.s32 2, 1
    %v97 = vld [vmem:[#allocation0] sm:%s96]
    %s99 = ssub.s32 2, 1
    %100 = vst [vmem:[%s1] sm:%s99] %v97

// kernel: mixed_op_forward.1
$region0: #{mixed_op_forward.1}
  #allocation0 [shape = 'u32[]', space=smem, size = 0x4, offset = 0x4, fixed_abs, tag = 'smem constant byte address 0x4 - core index']
  #allocation1 [shape = 'u32[72,128]{1,0:T(1,128)}', space=vmem, size = 0x9000, scoped, tag = 'internal scratch']
  #allocation2 [shape = 'f32[4,18,128]{2,1,0:T(8,128)}', space=vmem, size = 0xc000, scoped, tag = 'scratch operand']
  %s0 = inlined_call_operand.vmem [shape: f32[8,16,128], index: 0, kind: input, shape index: {}]
  %s1 = inlined_call_operand.vmem [shape: f32[128,256], index: 1, kind: input, shape index: {}]
  %s2 = inlined_call_operand.vmem [shape: f32[128,384], index: 2, kind: input, shape index: {}]
  %s3 = inlined_call_operand.vmem [shape: f32[128,384], index: 3, kind: input, shape index: {}]
  %s4 = inlined_call_operand.vmem [shape: f32[16,128], index: 4, kind: input, shape index: {}]
  %s5 = inlined_call_operand.vmem [shape: f32[5,16,128], index: 5, kind: input, shape index: {}]
  %s6 = inlined_call_operand.vmem [shape: f32[8,16,128], index: 6, kind: output, shape index: {}]
  %s7 = sld [smem:[#allocation0]]
  $region57: #{mixed_op_forward.1} parent=0
    _
  %s9 = ssub.s32 1, %s7
  %s10 = scalar_select 0, %s9, %s7
  loop: start=0, step=1, limit=4
  $region2: #{mixed_op_forward.1} parent=0 // loop_pre_header
    _
  $region3: #{mixed_op_forward.1} parent=0 // loop_header
    %s12 = sphi 0, %s16
    %p13 = scmp.ge.s32.totalorder %s12, 4
    %s22 = sphi 0, %s24
    %s25 = sphi 0, %s22
    %s26 = sphi 0, %s25
    %s42 = sphi 0, %s26
    %s46 = sphi 0, %s46
    %s48 = sphi 0, %s46
    %s49 = sphi 0, %s48
    %s63 = sphi 0, %s49
    %s67 = sphi 0, %s67
    %s69 = sphi 0, %s67
    %s70 = sphi 0, %s69
    %s84 = sphi 0, %s70
    %s88 = sphi 0, %s88
    %s90 = sphi 0, %s88
    %s91 = sphi 0, %s90
    %s105 = sphi 0, %s91
    %s109 = sphi 0, %s109
    %s111 = sphi 0, %s109
    %s112 = sphi 0, %s111
    %s126 = sphi 0, %s112
    %s130 = sphi 0, %s130
    %s132 = sphi 0, %s130
    %s133 = sphi 0, %s132
    %s147 = sphi 0, %s133
    %s153 = sphi 0, %s155
    %s156 = sphi 0, %s153
    %s157 = sphi 0, %s156
    %s173 = sphi 0, %s157
  $region4: #{mixed_op_forward.1} parent=0 // loop_header_branch
    %15 = sbr.rel (%p13) target = $region8
  $region5: #{mixed_op_forward.1} parent=0 // loop_body
    %s17 = ssub.s32 %s12, 1
    %s18 = ssub.s32 %s12, 2
    %s19 = sadd.s32 %s12, 1
    %s20 = ssub.s32 %s12, %s19
    %p21 = scmp.eq.s32.totalorder %s20, 0
    %s23 = sadd.s32 %s22, 1
    %s24 = scalar_select %p21, %s22, %s23
    %p27 = pneg %p21
    %p28 = scmp.eq.s32.totalorder %s12, 1
    %p29 = por %p27, %p28
    %p30 = scmp.ne.s32.totalorder %s22, %s25
    %p31 = scmp.eq.s32.totalorder %s12, 0
    %p32 = por %p30, %p31
    %p33 = scmp.ne.s32.totalorder %s22, %s25
    %p34 = scmp.eq.s32.totalorder %s17, 1
    %p35 = por %p33, %p34
    %p36 = scmp.ne.s32.totalorder %s25, %s26
    %p37 = scmp.eq.s32.totalorder %s17, 0
    %p38 = por %p36, %p37
    %p39 = scmp.ne.s32.totalorder %s25, %s26
    %p40 = scmp.eq.s32.totalorder %s18, 1
    %p41 = por %p39, %p40
    %p43 = scmp.ne.s32.totalorder %s26, %s42
    %p44 = scmp.eq.s32.totalorder %s18, 0
    %p45 = por %p43, %p44
    %s47 = sadd.s32 %s46, 1
    %p50 = scmp.eq.s32.totalorder %s12, 1
    %p51 = scmp.ne.s32.totalorder %s46, %s48
    %p52 = scmp.eq.s32.totalorder %s12, 0
    %p53 = por %p51, %p52
    %p54 = scmp.ne.s32.totalorder %s46, %s48
    %p55 = scmp.eq.s32.totalorder %s17, 1
    %p56 = por %p54, %p55
    %p57 = scmp.ne.s32.totalorder %s48, %s49
    %p58 = scmp.eq.s32.totalorder %s17, 0
    %p59 = por %p57, %p58
    %p60 = scmp.ne.s32.totalorder %s48, %s49
    %p61 = scmp.eq.s32.totalorder %s18, 1
    %p62 = por %p60, %p61
    %p64 = scmp.ne.s32.totalorder %s49, %s63
    %p65 = scmp.eq.s32.totalorder %s18, 0
    %p66 = por %p64, %p65
    %s68 = sadd.s32 %s67, 1
    %p71 = scmp.eq.s32.totalorder %s12, 1
    %p72 = scmp.ne.s32.totalorder %s67, %s69
    %p73 = scmp.eq.s32.totalorder %s12, 0
    %p74 = por %p72, %p73
    %p75 = scmp.ne.s32.totalorder %s67, %s69
    %p76 = scmp.eq.s32.totalorder %s17, 1
    %p77 = por %p75, %p76
    %p78 = scmp.ne.s32.totalorder %s69, %s70
    %p79 = scmp.eq.s32.totalorder %s17, 0
    %p80 = por %p78, %p79
    %p81 = scmp.ne.s32.totalorder %s69, %s70
    %p82 = scmp.eq.s32.totalorder %s18, 1
    %p83 = por %p81, %p82
    %p85 = scmp.ne.s32.totalorder %s70, %s84
    %p86 = scmp.eq.s32.totalorder %s18, 0
    %p87 = por %p85, %p86
    %s89 = sadd.s32 %s88, 1
    %p92 = scmp.eq.s32.totalorder %s12, 1
    %p93 = scmp.ne.s32.totalorder %s88, %s90
    %p94 = scmp.eq.s32.totalorder %s12, 0
    %p95 = por %p93, %p94
    %p96 = scmp.ne.s32.totalorder %s88, %s90
    %p97 = scmp.eq.s32.totalorder %s17, 1
    %p98 = por %p96, %p97
    %p99 = scmp.ne.s32.totalorder %s90, %s91
    %p100 = scmp.eq.s32.totalorder %s17, 0
    %p101 = por %p99, %p100
    %p102 = scmp.ne.s32.totalorder %s90, %s91
    %p103 = scmp.eq.s32.totalorder %s18, 1
    %p104 = por %p102, %p103
    %p106 = scmp.ne.s32.totalorder %s91, %s105
    %p107 = scmp.eq.s32.totalorder %s18, 0
    %p108 = por %p106, %p107
    %s110 = sadd.s32 %s109, 1
    %p113 = scmp.eq.s32.totalorder %s12, 1
    %p114 = scmp.ne.s32.totalorder %s109, %s111
    %p115 = scmp.eq.s32.totalorder %s12, 0
    %p116 = por %p114, %p115
    %p117 = scmp.ne.s32.totalorder %s109, %s111
    %p118 = scmp.eq.s32.totalorder %s17, 1
    %p119 = por %p117, %p118
    %p120 = scmp.ne.s32.totalorder %s111, %s112
    %p121 = scmp.eq.s32.totalorder %s17, 0
    %p122 = por %p120, %p121
    %p123 = scmp.ne.s32.totalorder %s111, %s112
    %p124 = scmp.eq.s32.totalorder %s18, 1
    %p125 = por %p123, %p124
    %p127 = scmp.ne.s32.totalorder %s112, %s126
    %p128 = scmp.eq.s32.totalorder %s18, 0
    %p129 = por %p127, %p128
    %s131 = sadd.s32 %s130, 1
    %p134 = scmp.eq.s32.totalorder %s12, 1
    %p135 = scmp.ne.s32.totalorder %s130, %s132
    %p136 = scmp.eq.s32.totalorder %s12, 0
    %p137 = por %p135, %p136
    %p138 = scmp.ne.s32.totalorder %s130, %s132
    %p139 = scmp.eq.s32.totalorder %s17, 1
    %p140 = por %p138, %p139
    %p141 = scmp.ne.s32.totalorder %s132, %s133
    %p142 = scmp.eq.s32.totalorder %s17, 0
    %p143 = por %p141, %p142
    %p144 = scmp.ne.s32.totalorder %s132, %s133
    %p145 = scmp.eq.s32.totalorder %s18, 1
    %p146 = por %p144, %p145
    %p148 = scmp.ne.s32.totalorder %s133, %s147
    %p149 = scmp.eq.s32.totalorder %s18, 0
    %p150 = por %p148, %p149
    %s151 = ssub.s32 %s12, %s19
    %p152 = scmp.eq.s32.totalorder %s151, 0
    %s154 = sadd.s32 %s153, 1
    %s155 = scalar_select %p152, %s153, %s154
    %p158 = pneg %p152
    %p159 = scmp.eq.s32.totalorder %s12, 1
    %p160 = por %p158, %p159
    %p161 = scmp.ne.s32.totalorder %s153, %s156
    %p162 = scmp.eq.s32.totalorder %s12, 0
    %p163 = por %p161, %p162
    %p164 = scmp.ne.s32.totalorder %s153, %s156
    %p165 = scmp.eq.s32.totalorder %s17, 1
    %p166 = por %p164, %p165
    %p167 = scmp.ne.s32.totalorder %s156, %s157
    %p168 = scmp.eq.s32.totalorder %s17, 0
    %p169 = por %p167, %p168
    %p170 = scmp.ne.s32.totalorder %s156, %s157
    %p171 = scmp.eq.s32.totalorder %s18, 1
    %p172 = por %p170, %p171
    %p174 = scmp.ne.s32.totalorder %s157, %s173
    %p175 = scmp.eq.s32.totalorder %s18, 0
    %p176 = por %p174, %p175
    %p177 = scmp.le.s32.totalorder 1, %s12
    %p178 = scmp.lt.s32.totalorder %s12, 3
    %p179 = pnand %p177, %p178
    %p180 = pneg %p179
    // Predicated region
    $region9: #{mixed_op_forward.1} parent=5 // pred_check
      _
    $region10: #{mixed_op_forward.1} parent=5 // pred_check_branch
      %182 = sbr.rel (%p179) target = $region12
    $region11: #{mixed_op_forward.1} parent=5 // pred_region
      %s183 = ssub.s32 %s12, 1
      // Predicated region
      $region13: #{mixed_op_forward.1} parent=11 // pred_check
        %p184 = pneg %p59
      $region14: #{mixed_op_forward.1} parent=11 // pred_check_branch
        %186 = sbr.rel (%p184) target = $region16
      $region15: #{mixed_op_forward.1} parent=11 // pred_region
        _
      $region16: #{mixed_op_forward.1} parent=11 // pred_fallthru
        _
      // Predicated region
      $region17: #{mixed_op_forward.1} parent=11 // pred_check
        %p187 = pneg %p80
      $region18: #{mixed_op_forward.1} parent=11 // pred_check_branch
        %189 = sbr.rel (%p187) target = $region20
      $region19: #{mixed_op_forward.1} parent=11 // pred_region
        _
      $region20: #{mixed_op_forward.1} parent=11 // pred_fallthru
        _
      // Predicated region
      $region21: #{mixed_op_forward.1} parent=11 // pred_check
        %p190 = pneg %p101
      $region22: #{mixed_op_forward.1} parent=11 // pred_check_branch
        %192 = sbr.rel (%p190) target = $region24
      $region23: #{mixed_op_forward.1} parent=11 // pred_region
        _
      $region24: #{mixed_op_forward.1} parent=11 // pred_fallthru
        _
      // Predicated region
      $region25: #{mixed_op_forward.1} parent=11 // pred_check
        %p193 = pneg %p122
      $region26: #{mixed_op_forward.1} parent=11 // pred_check_branch
        %195 = sbr.rel (%p193) target = $region28
      $region27: #{mixed_op_forward.1} parent=11 // pred_region
        _
      $region28: #{mixed_op_forward.1} parent=11 // pred_fallthru
        _
      // Predicated region
      $region29: #{mixed_op_forward.1} parent=11 // pred_check
        %p196 = pneg %p143
      $region30: #{mixed_op_forward.1} parent=11 // pred_check_branch
        %198 = sbr.rel (%p196) target = $region32
      $region31: #{mixed_op_forward.1} parent=11 // pred_region
        _
      $region32: #{mixed_op_forward.1} parent=11 // pred_fallthru
        _
    $region12: #{mixed_op_forward.1} parent=5 // pred_fallthru
      _
    %p199 = scmp.lt.s32.totalorder %s12, 2
    // Predicated region
    $region33: #{mixed_op_forward.1} parent=5 // pred_check
      %p200 = pneg %p199
    $region34: #{mixed_op_forward.1} parent=5 // pred_check_branch
      %202 = sbr.rel (%p200) target = $region36
    $region35: #{mixed_op_forward.1} parent=5 // pred_region
      // Predicated region
      $region37: #{mixed_op_forward.1} parent=35 // pred_check
        %p203 = pneg %p32
      $region38: #{mixed_op_forward.1} parent=35 // pred_check_branch
        %205 = sbr.rel (%p203) target = $region40
      $region39: #{mixed_op_forward.1} parent=35 // pred_region
        %s206 = smul.u32 4, %s12
        %p207 = scmp.lt.s32.totalorder %s206, 7
        %s208 = scalar_select %p207, %s206, 7
        %s209 = smul.addr %s208, 2
        %s210 = smul.addr %s209, 8
        %s211 = scalar_lea.vmem %s0, %s210
        %s212 = smul.u32 4, %s12
      $region40: #{mixed_op_forward.1} parent=35 // pred_fallthru
        _
    $region36: #{mixed_op_forward.1} parent=5 // pred_fallthru
      _
    %p213 = scmp.le.s32.totalorder 1, %s12
    %p214 = scmp.lt.s32.totalorder %s12, 3
    %p215 = pnand %p213, %p214
    %p216 = pneg %p215
    // Predicated region
    $region41: #{mixed_op_forward.1} parent=5 // pred_check
      _
    $region42: #{mixed_op_forward.1} parent=5 // pred_check_branch
      %218 = sbr.rel (%p215) target = $region44
    $region43: #{mixed_op_forward.1} parent=5 // pred_region
      %s219 = ssub.s32 %s12, 1
      %s220 = smul.u32 4, %s17
      %p221 = scmp.lt.s32.totalorder %s220, 7
      %s222 = scalar_select %p221, %s220, 7
      %s223 = smul.addr %s222, 2
      %s224 = smul.addr %s223, 8
      %s225 = scalar_lea.vmem %s0, %s224
      %p226 = pneg %p38
      %p227 = pneg %p35
      %p228 = pneg %p59
      %p229 = pneg %p56
      %p230 = pneg %p80
      %p231 = pneg %p77
      %p232 = pneg %p101
      %p233 = pneg %p98
      %p234 = pneg %p122
      %p235 = pneg %p119
      %p236 = pneg %p143
      %p237 = pneg %p140
      %p238 = pneg %p169
      %p239 = pneg %p166
      %s240 = smul.u32 4, %s17
      %p241 = scmp.lt.s32.totalorder %s240, 7
      %s242 = scalar_select %p241, %s240, 7
      %s243 = smul.addr %s242, 2
      %s244 = smul.addr %s243, 8
      %s245 = scalar_lea.vmem %s6, %s244
      %s246 = smul.u32 4, %s17
      %p247 = scmp.lt.s32.totalorder %s246, 7
      %s248 = scalar_select %p247, %s246, 7
      %s249 = smul.addr %s248, 2
      %s250 = smul.addr %s249, 8
      %s251 = scalar_lea.vmem %s0, %s250
      %s252 = smul.u32 4, %s17
      %s253 = smul.u32 4, %s17
      %p254 = scmp.lt.s32.totalorder %s253, 7
      %s255 = scalar_select %p254, %s253, 7
      %s256 = smul.addr %s255, 2
      %s257 = smul.addr %s256, 8
      %s258 = scalar_lea.vmem %s6, %s257
      %s259 = smul.u32 4, %s17
      %v260 = vld [vmem:[%s251] sm:$0xff]
      %v261 = vld [vmem:[%s251 + $0x8] sm:$0xff]
      %v262 = vld [vmem:[%s251 + $0x10] sm:$0xff]
      %v263 = vld [vmem:[%s251 + $0x18] sm:$0xff]
      %v264 = vld [vmem:[%s251 + $0x20] sm:$0xff]
      %v265 = vld [vmem:[%s251 + $0x28] sm:$0xff]
      %v266 = vld [vmem:[%s251 + $0x30] sm:$0xff]
      %v267 = vld [vmem:[%s251 + $0x38] sm:$0xff]
      %v268 = vlaneseq
      %v269 = vand.u32 %v268, 127
      %v270 = vlaneseq
      %v271 = vshrl.u32 %v270, 7
      %v272 = vadd.s32 %v271, 8
      %vm273 = vcmp.lt.s32.totalorder %v269, 120
      %vm274 = vcmp.ge.s32.totalorder %v269, 8
      %vm275 = vcmp.lt.s32.totalorder %v271, 15
      %vm276 = vcmp.lt.s32.totalorder %v272, 15
      %vm277 = vcmp.ge.s32.totalorder %v271, 1
      %vm278 = vcmp.ge.s32.totalorder %v272, 1
      %279 = vst [vmem:[#allocation2] sm:$0x1] 0.0
      %280 = vst [vmem:[#allocation2 + $0x18] sm:$0x1] 0.0
      %281 = vst [vmem:[#allocation2 + $0x30] sm:$0x1] 0.0
      %282 = vst [vmem:[#allocation2 + $0x48] sm:$0x1] 0.0
      %283 = vst [vmem:[#allocation2 + $0x11] sm:$0x1] 0.0
      %284 = vst [vmem:[#allocation2 + $0x29] sm:$0x1] 0.0
      %285 = vst [vmem:[#allocation2 + $0x41] sm:$0x1] 0.0
      %286 = vst [vmem:[#allocation2 + $0x59] sm:$0x1] 0.0
      %v287 = vld [vmem:[%s1] sm:$0xff]
      %v288 = vld [vmem:[%s1 + $0x8] sm:$0xff]
      %v289 = vld [vmem:[%s1 + $0x10] sm:$0xff]
      %v290 = vld [vmem:[%s1 + $0x18] sm:$0xff]
      %v291 = vld [vmem:[%s1 + $0x20] sm:$0xff]
      %v292 = vld [vmem:[%s1 + $0x28] sm:$0xff]
      %v293 = vld [vmem:[%s1 + $0x30] sm:$0xff]
      %v294 = vld [vmem:[%s1 + $0x38] sm:$0xff]
      %v295 = vld [vmem:[%s1 + $0x40] sm:$0xff]
      %v296 = vld [vmem:[%s1 + $0x48] sm:$0xff]
      %v297 = vld [vmem:[%s1 + $0x50] sm:$0xff]
      %v298 = vld [vmem:[%s1 + $0x58] sm:$0xff]
      %v299 = vld [vmem:[%s1 + $0x60] sm:$0xff]
      %v300 = vld [vmem:[%s1 + $0x68] sm:$0xff]
      %v301 = vld [vmem:[%s1 + $0x70] sm:$0xff]
      %v302 = vld [vmem:[%s1 + $0x78] sm:$0xff]
      %v303 = vld [vmem:[%s1 + $0x80] sm:$0xff]
      %v304 = vld [vmem:[%s1 + $0x88] sm:$0xff]
      %v305 = vld [vmem:[%s1 + $0x90] sm:$0xff]
      %v306 = vld [vmem:[%s1 + $0x98] sm:$0xff]
      %v307 = vld [vmem:[%s1 + $0xa0] sm:$0xff]
      %v308 = vld [vmem:[%s1 + $0xa8] sm:$0xff]
      %v309 = vld [vmem:[%s1 + $0xb0] sm:$0xff]
      %v310 = vld [vmem:[%s1 + $0xb8] sm:$0xff]
      %v311 = vld [vmem:[%s1 + $0xc0] sm:$0xff]
      %v312 = vld [vmem:[%s1 + $0xc8] sm:$0xff]
      %v313 = vld [vmem:[%s1 + $0xd0] sm:$0xff]
      %v314 = vld [vmem:[%s1 + $0xd8] sm:$0xff]
      %v315 = vld [vmem:[%s1 + $0xe0] sm:$0xff]
      %v316 = vld [vmem:[%s1 + $0xe8] sm:$0xff]
      %v317 = vld [vmem:[%s1 + $0xf0] sm:$0xff]
      %v318 = vld [vmem:[%s1 + $0xf8] sm:$0xff]
      %319 = vmatpush.msra.mxu0 %v317
      %320 = vmatpush.msra.mxu0 %v315
      %321 = vmatpush.msra.mxu0 %v313
      %322 = vmatpush.msra.mxu0 %v311
      %323 = vmatpush.msra.mxu0 %v309
      %324 = vmatpush.msra.mxu0 %v307
      %325 = vmatpush.msra.mxu0 %v305
      %326 = vmatpush.msra.mxu0 %v303
      %327 = vmatpush.msra.mxu0 %v301
      %328 = vmatpush.msra.mxu0 %v299
      %329 = vmatpush.msra.mxu0 %v297
      %330 = vmatpush.msra.mxu0 %v295
      %331 = vmatpush.msra.mxu0 %v293
      %332 = vmatpush.msra.mxu0 %v291
      %333 = vmatpush.msra.mxu0 %v289
      %334 = vmatpush.msra.mxu0 %v287
      %335 = vmatmul.f32.gmra.mxu0 %v260
      %v336 = vpop.f32.mrf.mxu0
      %v337 = vadd.f32 0.0, %v336
      %338 = vmatmul.f32.gmra.mxu0 %v261
      %v339 = vpop.f32.mrf.mxu0
      %v340 = vadd.f32 0.0, %v339
      %341 = vmatmul.f32.gmra.mxu0 %v262
      %v342 = vpop.f32.mrf.mxu0
      %v343 = vadd.f32 0.0, %v342
      %344 = vmatmul.f32.gmra.mxu0 %v263
      %v345 = vpop.f32.mrf.mxu0
      %v346 = vadd.f32 0.0, %v345
      %347 = vmatmul.f32.gmra.mxu0 %v264
      %v348 = vpop.f32.mrf.mxu0
      %v349 = vadd.f32 0.0, %v348
      %350 = vmatmul.f32.gmra.mxu0 %v265
      %v351 = vpop.f32.mrf.mxu0
      %v352 = vadd.f32 0.0, %v351
      %353 = vmatmul.f32.gmra.mxu0 %v266
      %v354 = vpop.f32.mrf.mxu0
      %v355 = vadd.f32 0.0, %v354
      %356 = vmatmul.f32.gmra.mxu0 %v267
      %v357 = vpop.f32.mrf.mxu0
      %v358 = vadd.f32 0.0, %v357
      %359 = vdwg.mxu0
      %360 = vmatpush.msra.mxu0 %v318
      %361 = vmatpush.msra.mxu0 %v316
      %362 = vmatpush.msra.mxu0 %v314
      %363 = vmatpush.msra.mxu0 %v312
      %364 = vmatpush.msra.mxu0 %v310
      %365 = vmatpush.msra.mxu0 %v308
      %366 = vmatpush.msra.mxu0 %v306
      %367 = vmatpush.msra.mxu0 %v304
      %368 = vmatpush.msra.mxu0 %v302
      %369 = vmatpush.msra.mxu0 %v300
      %370 = vmatpush.msra.mxu0 %v298
      %371 = vmatpush.msra.mxu0 %v296
      %372 = vmatpush.msra.mxu0 %v294
      %373 = vmatpush.msra.mxu0 %v292
      %374 = vmatpush.msra.mxu0 %v290
      %375 = vmatpush.msra.mxu0 %v288
      %376 = vmatmul.f32.gmra.mxu0 %v260
      %v377 = vpop.f32.mrf.mxu0
      %v378 = vadd.f32 0.0, %v377
      %379 = vmatmul.f32.gmra.mxu0 %v261
      %v380 = vpop.f32.mrf.mxu0
      %v381 = vadd.f32 0.0, %v380
      %382 = vmatmul.f32.gmra.mxu0 %v262
      %v383 = vpop.f32.mrf.mxu0
      %v384 = vadd.f32 0.0, %v383
      %385 = vmatmul.f32.gmra.mxu0 %v263
      %v386 = vpop.f32.mrf.mxu0
      %v387 = vadd.f32 0.0, %v386
      %388 = vmatmul.f32.gmra.mxu0 %v264
      %v389 = vpop.f32.mrf.mxu0
      %v390 = vadd.f32 0.0, %v389
      %391 = vmatmul.f32.gmra.mxu0 %v265
      %v392 = vpop.f32.mrf.mxu0
      %v393 = vadd.f32 0.0, %v392
      %394 = vmatmul.f32.gmra.mxu0 %v266
      %v395 = vpop.f32.mrf.mxu0
      %v396 = vadd.f32 0.0, %v395
      %397 = vmatmul.f32.gmra.mxu0 %v267
      %v398 = vpop.f32.mrf.mxu0
      %v399 = vadd.f32 0.0, %v398
      %400 = vdwg.mxu0
      %v401 = vadd.f32 %v260, %v337
      %v402 = vadd.f32 %v261, %v340
      %v403 = vadd.f32 %v262, %v343
      %v404 = vadd.f32 %v263, %v346
      %v405 = vadd.f32 %v264, %v349
      %v406 = vadd.f32 %v265, %v352
      %v407 = vadd.f32 %v266, %v355
      %v408 = vadd.f32 %v267, %v358
      %v409 = vadd.f32 %v401, %v378
      %v410 = vadd.f32 %v402, %v381
      %v411 = vadd.f32 %v403, %v384
      %v412 = vadd.f32 %v404, %v387
      %v413 = vadd.f32 %v405, %v390
      %v414 = vadd.f32 %v406, %v393
      %v415 = vadd.f32 %v407, %v396
      %v416 = vadd.f32 %v408, %v399
      %v417 = vsel %vm273, %v337, %v260
      %v418 = vsel %vm273, %v340, %v261
      %v419 = vsel %vm273, %v343, %v262
      %v420 = vsel %vm273, %v346, %v263
      %v421 = vsel %vm273, %v349, %v264
      %v422 = vsel %vm273, %v352, %v265
      %v423 = vsel %vm273, %v355, %v266
      %v424 = vsel %vm273, %v358, %v267
      %v425 = vsel %vm274, %v378, %v260
      %v426 = vsel %vm274, %v381, %v261
      %v427 = vsel %vm274, %v384, %v262
      %v428 = vsel %vm274, %v387, %v263
      %v429 = vsel %vm274, %v390, %v264
      %v430 = vsel %vm274, %v393, %v265
      %v431 = vsel %vm274, %v396, %v266
      %v432 = vsel %vm274, %v399, %v267
      %v433 = vmax.f32 %v417, %v425
      %v434 = vmax.f32 %v418, %v426
      %v435 = vmax.f32 %v419, %v427
      %v436 = vmax.f32 %v420, %v428
      %v437 = vmax.f32 %v421, %v429
      %v438 = vmax.f32 %v422, %v430
      %v439 = vmax.f32 %v423, %v431
      %v440 = vmax.f32 %v424, %v432
      %v441 = vmax.f32 %v260, %v433
      %v442 = vmax.f32 %v261, %v434
      %v443 = vmax.f32 %v262, %v435
      %v444 = vmax.f32 %v263, %v436
      %v445 = vmax.f32 %v264, %v437
      %v446 = vmax.f32 %v265, %v438
      %v447 = vmax.f32 %v266, %v439
      %v448 = vmax.f32 %v267, %v440
      %449 = vst [vmem:[#allocation2 + $0x1] sm:$0xff] %v409
      %450 = vst [vmem:[#allocation2 + $0x9] sm:$0xff] %v410
      %451 = vst [vmem:[#allocation2 + $0x19] sm:$0xff] %v411
      %452 = vst [vmem:[#allocation2 + $0x21] sm:$0xff] %v412
      %453 = vst [vmem:[#allocation2 + $0x31] sm:$0xff] %v413
      %454 = vst [vmem:[#allocation2 + $0x39] sm:$0xff] %v414
      %455 = vst [vmem:[#allocation2 + $0x49] sm:$0xff] %v415
      %456 = vst [vmem:[#allocation2 + $0x51] sm:$0xff] %v416
      %v457 = vld [vmem:[#allocation2] sm:$0xff]
      %v458 = vld [vmem:[#allocation2 + $0x8] sm:$0xff]
      %v459 = vld [vmem:[#allocation2 + $0x18] sm:$0xff]
      %v460 = vld [vmem:[#allocation2 + $0x20] sm:$0xff]
      %v461 = vld [vmem:[#allocation2 + $0x30] sm:$0xff]
      %v462 = vld [vmem:[#allocation2 + $0x38] sm:$0xff]
      %v463 = vld [vmem:[#allocation2 + $0x48] sm:$0xff]
      %v464 = vld [vmem:[#allocation2 + $0x50] sm:$0xff]
      %v465 = vadd.f32 %v409, %v457
      %v466 = vadd.f32 %v410, %v458
      %v467 = vadd.f32 %v411, %v459
      %v468 = vadd.f32 %v412, %v460
      %v469 = vadd.f32 %v413, %v461
      %v470 = vadd.f32 %v414, %v462
      %v471 = vadd.f32 %v415, %v463
      %v472 = vadd.f32 %v416, %v464
      %v473 = vld [vmem:[#allocation2 + $0x2] sm:$0xff]
      %v474 = vld [vmem:[#allocation2 + $0xa] sm:$0xff]
      %v475 = vld [vmem:[#allocation2 + $0x1a] sm:$0xff]
      %v476 = vld [vmem:[#allocation2 + $0x22] sm:$0xff]
      %v477 = vld [vmem:[#allocation2 + $0x32] sm:$0xff]
      %v478 = vld [vmem:[#allocation2 + $0x3a] sm:$0xff]
      %v479 = vld [vmem:[#allocation2 + $0x4a] sm:$0xff]
      %v480 = vld [vmem:[#allocation2 + $0x52] sm:$0xff]
      %v481 = vadd.f32 %v465, %v473
      %v482 = vadd.f32 %v466, %v474
      %v483 = vadd.f32 %v467, %v475
      %v484 = vadd.f32 %v468, %v476
      %v485 = vadd.f32 %v469, %v477
      %v486 = vadd.f32 %v470, %v478
      %v487 = vadd.f32 %v471, %v479
      %v488 = vadd.f32 %v472, %v480
      %v489 = vld [vmem:[%s4] sm:$0xff]
      %v490 = vld [vmem:[%s4 + $0x8] sm:$0xff]
      %v491 = vmul.f32 %v481, %v489
      %v492 = vmul.f32 %v482, %v490
      %v493 = vmul.f32 %v483, %v489
      %v494 = vmul.f32 %v484, %v490
      %v495 = vmul.f32 %v485, %v489
      %v496 = vmul.f32 %v486, %v490
      %v497 = vmul.f32 %v487, %v489
      %v498 = vmul.f32 %v488, %v490
      %v499 = vld [vmem:[%s5] sm:$0xff]
      %v500 = vld [vmem:[%s5 + $0x8] sm:$0xff]
      %v501 = vadd.f32 %v491, %v499
      %v502 = vadd.f32 %v492, %v500
      %v503 = vadd.f32 %v493, %v499
      %v504 = vadd.f32 %v494, %v500
      %v505 = vadd.f32 %v495, %v499
      %v506 = vadd.f32 %v496, %v500
      %v507 = vadd.f32 %v497, %v499
      %v508 = vadd.f32 %v498, %v500
      %509 = vst [vmem:[#allocation2 + $0x1] sm:$0xff] %v441
      %510 = vst [vmem:[#allocation2 + $0x9] sm:$0xff] %v442
      %511 = vst [vmem:[#allocation2 + $0x19] sm:$0xff] %v443
      %512 = vst [vmem:[#allocation2 + $0x21] sm:$0xff] %v444
      %513 = vst [vmem:[#allocation2 + $0x31] sm:$0xff] %v445
      %514 = vst [vmem:[#allocation2 + $0x39] sm:$0xff] %v446
      %515 = vst [vmem:[#allocation2 + $0x49] sm:$0xff] %v447
      %516 = vst [vmem:[#allocation2 + $0x51] sm:$0xff] %v448
      %v517 = vld [vmem:[#allocation2 + $0x2] sm:$0xff]
      %v518 = vld [vmem:[#allocation2 + $0xa] sm:$0xff]
      %v519 = vld [vmem:[#allocation2 + $0x1a] sm:$0xff]
      %v520 = vld [vmem:[#allocation2 + $0x22] sm:$0xff]
      %v521 = vld [vmem:[#allocation2 + $0x32] sm:$0xff]
      %v522 = vld [vmem:[#allocation2 + $0x3a] sm:$0xff]
      %v523 = vld [vmem:[#allocation2 + $0x4a] sm:$0xff]
      %v524 = vld [vmem:[#allocation2 + $0x52] sm:$0xff]
      %v525 = vsel %vm275, %v517, %v441
      %v526 = vsel %vm276, %v518, %v442
      %v527 = vsel %vm275, %v519, %v443
      %v528 = vsel %vm276, %v520, %v444
      %v529 = vsel %vm275, %v521, %v445
      %v530 = vsel %vm276, %v522, %v446
      %v531 = vsel %vm275, %v523, %v447
      %v532 = vsel %vm276, %v524, %v448
      %v533 = vld [vmem:[#allocation2] sm:$0xff]
      %v534 = vld [vmem:[#allocation2 + $0x8] sm:$0xff]
      %v535 = vld [vmem:[#allocation2 + $0x18] sm:$0xff]
      %v536 = vld [vmem:[#allocation2 + $0x20] sm:$0xff]
      %v537 = vld [vmem:[#allocation2 + $0x30] sm:$0xff]
      %v538 = vld [vmem:[#allocation2 + $0x38] sm:$0xff]
      %v539 = vld [vmem:[#allocation2 + $0x48] sm:$0xff]
      %v540 = vld [vmem:[#allocation2 + $0x50] sm:$0xff]
      %v541 = vsel %vm277, %v533, %v441
      %v542 = vsel %vm278, %v534, %v442
      %v543 = vsel %vm277, %v535, %v443
      %v544 = vsel %vm278, %v536, %v444
      %v545 = vsel %vm277, %v537, %v445
      %v546 = vsel %vm278, %v538, %v446
      %v547 = vsel %vm277, %v539, %v447
      %v548 = vsel %vm278, %v540, %v448
      %v549 = vmax.f32 %v525, %v541
      %v550 = vmax.f32 %v526, %v542
      %v551 = vmax.f32 %v527, %v543
      %v552 = vmax.f32 %v528, %v544
      %v553 = vmax.f32 %v529, %v545
      %v554 = vmax.f32 %v530, %v546
      %v555 = vmax.f32 %v531, %v547
      %v556 = vmax.f32 %v532, %v548
      %v557 = vmax.f32 %v441, %v549
      %v558 = vmax.f32 %v442, %v550
      %v559 = vmax.f32 %v443, %v551
      %v560 = vmax.f32 %v444, %v552
      %v561 = vmax.f32 %v445, %v553
      %v562 = vmax.f32 %v446, %v554
      %v563 = vmax.f32 %v447, %v555
      %v564 = vmax.f32 %v448, %v556
      %s565 = scalar_lea.vmem %s5, 16
      %v566 = vld [vmem:[%s565] sm:$0xff]
      %v567 = vld [vmem:[%s565 + $0x8] sm:$0xff]
      %v568 = vmul.f32 %v557, %v566
      %v569 = vmul.f32 %v558, %v567
      %v570 = vmul.f32 %v559, %v566
      %v571 = vmul.f32 %v560, %v567
      %v572 = vmul.f32 %v561, %v566
      %v573 = vmul.f32 %v562, %v567
      %v574 = vmul.f32 %v563, %v566
      %v575 = vmul.f32 %v564, %v567
      %s576 = scalar_lea.vmem %s5, 32
      %v577 = vld [vmem:[%s576] sm:$0xff]
      %v578 = vld [vmem:[%s576 + $0x8] sm:$0xff]
      %v579 = vadd.f32 %v568, %v577
      %v580 = vadd.f32 %v569, %v578
      %v581 = vadd.f32 %v570, %v577
      %v582 = vadd.f32 %v571, %v578
      %v583 = vadd.f32 %v572, %v577
      %v584 = vadd.f32 %v573, %v578
      %v585 = vadd.f32 %v574, %v577
      %v586 = vadd.f32 %v575, %v578
      %s587 = scalar_lea.vmem %s5, 48
      %v588 = vld [vmem:[%s587] sm:$0xff]
      %v589 = vld [vmem:[%s587 + $0x8] sm:$0xff]
      %v590 = vmax.f32 %v260, 0.0
      %v591 = vmax.f32 %v261, 0.0
      %v592 = vmax.f32 %v262, 0.0
      %v593 = vmax.f32 %v263, 0.0
      %v594 = vmax.f32 %v264, 0.0
      %v595 = vmax.f32 %v265, 0.0
      %v596 = vmax.f32 %v266, 0.0
      %v597 = vmax.f32 %v267, 0.0
      %v598 = vld [vmem:[%s2] sm:$0xff]
      %v599 = vld [vmem:[%s2 + $0x8] sm:$0xff]
      %v600 = vld [vmem:[%s2 + $0x10] sm:$0xff]
      %v601 = vld [vmem:[%s2 + $0x18] sm:$0xff]
      %v602 = vld [vmem:[%s2 + $0x20] sm:$0xff]
      %v603 = vld [vmem:[%s2 + $0x28] sm:$0xff]
      %v604 = vld [vmem:[%s2 + $0x30] sm:$0xff]
      %v605 = vld [vmem:[%s2 + $0x38] sm:$0xff]
      %v606 = vld [vmem:[%s2 + $0x40] sm:$0xff]
      %v607 = vld [vmem:[%s2 + $0x48] sm:$0xff]
      %v608 = vld [vmem:[%s2 + $0x50] sm:$0xff]
      %v609 = vld [vmem:[%s2 + $0x58] sm:$0xff]
      %v610 = vld [vmem:[%s2 + $0x60] sm:$0xff]
      %v611 = vld [vmem:[%s2 + $0x68] sm:$0xff]
      %v612 = vld [vmem:[%s2 + $0x70] sm:$0xff]
      %v613 = vld [vmem:[%s2 + $0x78] sm:$0xff]
      %v614 = vld [vmem:[%s2 + $0x80] sm:$0xff]
      %v615 = vld [vmem:[%s2 + $0x88] sm:$0xff]
      %v616 = vld [vmem:[%s2 + $0x90] sm:$0xff]
      %v617 = vld [vmem:[%s2 + $0x98] sm:$0xff]
      %v618 = vld [vmem:[%s2 + $0xa0] sm:$0xff]
      %v619 = vld [vmem:[%s2 + $0xa8] sm:$0xff]
      %v620 = vld [vmem:[%s2 + $0xb0] sm:$0xff]
      %v621 = vld [vmem:[%s2 + $0xb8] sm:$0xff]
      %v622 = vld [vmem:[%s2 + $0xc0] sm:$0xff]
      %v623 = vld [vmem:[%s2 + $0xc8] sm:$0xff]
      %v624 = vld [vmem:[%s2 + $0xd0] sm:$0xff]
      %v625 = vld [vmem:[%s2 + $0xd8] sm:$0xff]
      %v626 = vld [vmem:[%s2 + $0xe0] sm:$0xff]
      %v627 = vld [vmem:[%s2 + $0xe8] sm:$0xff]
      %v628 = vld [vmem:[%s2 + $0xf0] sm:$0xff]
      %v629 = vld [vmem:[%s2 + $0xf8] sm:$0xff]
      %v630 = vld [vmem:[%s2 + $0x100] sm:$0xff]
      %v631 = vld [vmem:[%s2 + $0x108] sm:$0xff]
      %v632 = vld [vmem:[%s2 + $0x110] sm:$0xff]
      %v633 = vld [vmem:[%s2 + $0x118] sm:$0xff]
      %v634 = vld [vmem:[%s2 + $0x120] sm:$0xff]
      %v635 = vld [vmem:[%s2 + $0x128] sm:$0xff]
      %v636 = vld [vmem:[%s2 + $0x130] sm:$0xff]
      %v637 = vld [vmem:[%s2 + $0x138] sm:$0xff]
      %v638 = vld [vmem:[%s2 + $0x140] sm:$0xff]
      %v639 = vld [vmem:[%s2 + $0x148] sm:$0xff]
      %v640 = vld [vmem:[%s2 + $0x150] sm:$0xff]
      %v641 = vld [vmem:[%s2 + $0x158] sm:$0xff]
      %v642 = vld [vmem:[%s2 + $0x160] sm:$0xff]
      %v643 = vld [vmem:[%s2 + $0x168] sm:$0xff]
      %v644 = vld [vmem:[%s2 + $0x170] sm:$0xff]
      %v645 = vld [vmem:[%s2 + $0x178] sm:$0xff]
      %646 = vmatpush.msra.mxu0 %v643
      %647 = vmatpush.msra.mxu0 %v640
      %648 = vmatpush.msra.mxu0 %v637
      %649 = vmatpush.msra.mxu0 %v634
      %650 = vmatpush.msra.mxu0 %v631
      %651 = vmatpush.msra.mxu0 %v628
      %652 = vmatpush.msra.mxu0 %v625
      %653 = vmatpush.msra.mxu0 %v622
      %654 = vmatpush.msra.mxu0 %v619
      %655 = vmatpush.msra.mxu0 %v616
      %656 = vmatpush.msra.mxu0 %v613
      %657 = vmatpush.msra.mxu0 %v610
      %658 = vmatpush.msra.mxu0 %v607
      %659 = vmatpush.msra.mxu0 %v604
      %660 = vmatpush.msra.mxu0 %v601
      %661 = vmatpush.msra.mxu0 %v598
      %662 = vmatmul.f32.gmra.mxu0 %v590
      %v663 = vpop.f32.mrf.mxu0
      %v664 = vadd.f32 0.0, %v663
      %665 = vmatmul.f32.gmra.mxu0 %v591
      %v666 = vpop.f32.mrf.mxu0
      %v667 = vadd.f32 0.0, %v666
      %668 = vmatmul.f32.gmra.mxu0 %v592
      %v669 = vpop.f32.mrf.mxu0
      %v670 = vadd.f32 0.0, %v669
      %671 = vmatmul.f32.gmra.mxu0 %v593
      %v672 = vpop.f32.mrf.mxu0
      %v673 = vadd.f32 0.0, %v672
      %674 = vmatmul.f32.gmra.mxu0 %v594
      %v675 = vpop.f32.mrf.mxu0
      %v676 = vadd.f32 0.0, %v675
      %677 = vmatmul.f32.gmra.mxu0 %v595
      %v678 = vpop.f32.mrf.mxu0
      %v679 = vadd.f32 0.0, %v678
      %680 = vmatmul.f32.gmra.mxu0 %v596
      %v681 = vpop.f32.mrf.mxu0
      %v682 = vadd.f32 0.0, %v681
      %683 = vmatmul.f32.gmra.mxu0 %v597
      %v684 = vpop.f32.mrf.mxu0
      %v685 = vadd.f32 0.0, %v684
      %686 = vdwg.mxu0
      %687 = vmatpush.msra.mxu0 %v644
      %688 = vmatpush.msra.mxu0 %v641
      %689 = vmatpush.msra.mxu0 %v638
      %690 = vmatpush.msra.mxu0 %v635
      %691 = vmatpush.msra.mxu0 %v632
      %692 = vmatpush.msra.mxu0 %v629
      %693 = vmatpush.msra.mxu0 %v626
      %694 = vmatpush.msra.mxu0 %v623
      %695 = vmatpush.msra.mxu0 %v620
      %696 = vmatpush.msra.mxu0 %v617
      %697 = vmatpush.msra.mxu0 %v614
      %698 = vmatpush.msra.mxu0 %v611
      %699 = vmatpush.msra.mxu0 %v608
      %700 = vmatpush.msra.mxu0 %v605
      %701 = vmatpush.msra.mxu0 %v602
      %702 = vmatpush.msra.mxu0 %v599
      %703 = vmatmul.f32.gmra.mxu0 %v590
      %v704 = vpop.f32.mrf.mxu0
      %v705 = vadd.f32 0.0, %v704
      %706 = vmatmul.f32.gmra.mxu0 %v591
      %v707 = vpop.f32.mrf.mxu0
      %v708 = vadd.f32 0.0, %v707
      %709 = vmatmul.f32.gmra.mxu0 %v592
      %v710 = vpop.f32.mrf.mxu0
      %v711 = vadd.f32 0.0, %v710
      %712 = vmatmul.f32.gmra.mxu0 %v593
      %v713 = vpop.f32.mrf.mxu0
      %v714 = vadd.f32 0.0, %v713
      %715 = vmatmul.f32.gmra.mxu0 %v594
      %v716 = vpop.f32.mrf.mxu0
      %v717 = vadd.f32 0.0, %v716
      %718 = vmatmul.f32.gmra.mxu0 %v595
      %v719 = vpop.f32.mrf.mxu0
      %v720 = vadd.f32 0.0, %v719
      %721 = vmatmul.f32.gmra.mxu0 %v596
      %v722 = vpop.f32.mrf.mxu0
      %v723 = vadd.f32 0.0, %v722
      %724 = vmatmul.f32.gmra.mxu0 %v597
      %v725 = vpop.f32.mrf.mxu0
      %v726 = vadd.f32 0.0, %v725
      %727 = vdwg.mxu0
      %728 = vmatpush.msra.mxu0 %v645
      %729 = vmatpush.msra.mxu0 %v642
      %730 = vmatpush.msra.mxu0 %v639
      %731 = vmatpush.msra.mxu0 %v636
      %732 = vmatpush.msra.mxu0 %v633
      %733 = vmatpush.msra.mxu0 %v630
      %734 = vmatpush.msra.mxu0 %v627
      %735 = vmatpush.msra.mxu0 %v624
      %736 = vmatpush.msra.mxu0 %v621
      %737 = vmatpush.msra.mxu0 %v618
      %738 = vmatpush.msra.mxu0 %v615
      %739 = vmatpush.msra.mxu0 %v612
      %740 = vmatpush.msra.mxu0 %v609
      %741 = vmatpush.msra.mxu0 %v606
      %742 = vmatpush.msra.mxu0 %v603
      %743 = vmatpush.msra.mxu0 %v600
      %744 = vmatmul.f32.gmra.mxu0 %v590
      %v745 = vpop.f32.mrf.mxu0
      %v746 = vadd.f32 0.0, %v745
      %747 = vmatmul.f32.gmra.mxu0 %v591
      %v748 = vpop.f32.mrf.mxu0
      %v749 = vadd.f32 0.0, %v748
      %750 = vmatmul.f32.gmra.mxu0 %v592
      %v751 = vpop.f32.mrf.mxu0
      %v752 = vadd.f32 0.0, %v751
      %753 = vmatmul.f32.gmra.mxu0 %v593
      %v754 = vpop.f32.mrf.mxu0
      %v755 = vadd.f32 0.0, %v754
      %756 = vmatmul.f32.gmra.mxu0 %v594
      %v757 = vpop.f32.mrf.mxu0
      %v758 = vadd.f32 0.0, %v757
      %759 = vmatmul.f32.gmra.mxu0 %v595
      %v760 = vpop.f32.mrf.mxu0
      %v761 = vadd.f32 0.0, %v760
      %762 = vmatmul.f32.gmra.mxu0 %v596
      %v763 = vpop.f32.mrf.mxu0
      %v764 = vadd.f32 0.0, %v763
      %765 = vmatmul.f32.gmra.mxu0 %v597
      %v766 = vpop.f32.mrf.mxu0
      %v767 = vadd.f32 0.0, %v766
      %768 = vdwg.mxu0
      %769 = vst [vmem:[#allocation2 + $0x1] sm:$0xff] %v664
      %770 = vst [vmem:[#allocation2 + $0x9] sm:$0xff] %v667
      %771 = vst [vmem:[#allocation2 + $0x19] sm:$0xff] %v670
      %772 = vst [vmem:[#allocation2 + $0x21] sm:$0xff] %v673
      %773 = vst [vmem:[#allocation2 + $0x31] sm:$0xff] %v676
      %774 = vst [vmem:[#allocation2 + $0x39] sm:$0xff] %v679
      %775 = vst [vmem:[#allocation2 + $0x49] sm:$0xff] %v682
      %776 = vst [vmem:[#allocation2 + $0x51] sm:$0xff] %v685
      %v777 = vld [vmem:[#allocation2] sm:$0xff]
      %v778 = vld [vmem:[#allocation2 + $0x8] sm:$0xff]
      %v779 = vld [vmem:[#allocation2 + $0x18] sm:$0xff]
      %v780 = vld [vmem:[#allocation2 + $0x20] sm:$0xff]
      %v781 = vld [vmem:[#allocation2 + $0x30] sm:$0xff]
      %v782 = vld [vmem:[#allocation2 + $0x38] sm:$0xff]
      %v783 = vld [vmem:[#allocation2 + $0x48] sm:$0xff]
      %v784 = vld [vmem:[#allocation2 + $0x50] sm:$0xff]
      %v785 = vadd.f32 %v705, %v777
      %v786 = vadd.f32 %v708, %v778
      %v787 = vadd.f32 %v711, %v779
      %v788 = vadd.f32 %v714, %v780
      %v789 = vadd.f32 %v717, %v781
      %v790 = vadd.f32 %v720, %v782
      %v791 = vadd.f32 %v723, %v783
      %v792 = vadd.f32 %v726, %v784
      %793 = vst [vmem:[#allocation2 + $0x1] sm:$0xff] %v746
      %794 = vst [vmem:[#allocation2 + $0x9] sm:$0xff] %v749
      %795 = vst [vmem:[#allocation2 + $0x19] sm:$0xff] %v752
      %796 = vst [vmem:[#allocation2 + $0x21] sm:$0xff] %v755
      %797 = vst [vmem:[#allocation2 + $0x31] sm:$0xff] %v758
      %798 = vst [vmem:[#allocation2 + $0x39] sm:$0xff] %v761
      %799 = vst [vmem:[#allocation2 + $0x49] sm:$0xff] %v764
      %800 = vst [vmem:[#allocation2 + $0x51] sm:$0xff] %v767
      %v801 = vld [vmem:[#allocation2 + $0x2] sm:$0xff]
      %v802 = vld [vmem:[#allocation2 + $0xa] sm:$0xff]
      %v803 = vld [vmem:[#allocation2 + $0x1a] sm:$0xff]
      %v804 = vld [vmem:[#allocation2 + $0x22] sm:$0xff]
      %v805 = vld [vmem:[#allocation2 + $0x32] sm:$0xff]
      %v806 = vld [vmem:[#allocation2 + $0x3a] sm:$0xff]
      %v807 = vld [vmem:[#allocation2 + $0x4a] sm:$0xff]
      %v808 = vld [vmem:[#allocation2 + $0x52] sm:$0xff]
      %v809 = vadd.f32 %v785, %v801
      %v810 = vadd.f32 %v786, %v802
      %v811 = vadd.f32 %v787, %v803
      %v812 = vadd.f32 %v788, %v804
      %v813 = vadd.f32 %v789, %v805
      %v814 = vadd.f32 %v790, %v806
      %v815 = vadd.f32 %v791, %v807
      %v816 = vadd.f32 %v792, %v808
      %v817 = vadd.f32 %v809, %v588
      %v818 = vadd.f32 %v810, %v589
      %v819 = vadd.f32 %v811, %v588
      %v820 = vadd.f32 %v812, %v589
      %v821 = vadd.f32 %v813, %v588
      %v822 = vadd.f32 %v814, %v589
      %v823 = vadd.f32 %v815, %v588
      %v824 = vadd.f32 %v816, %v589
      %s825 = scalar_lea.vmem %s5, 64
      %v826 = vld [vmem:[%s825] sm:$0xff]
      %v827 = vld [vmem:[%s825 + $0x8] sm:$0xff]
      %v828 = vmax.f32 %v817, 0.0
      %v829 = vmax.f32 %v818, 0.0
      %v830 = vmax.f32 %v819, 0.0
      %v831 = vmax.f32 %v820, 0.0
      %v832 = vmax.f32 %v821, 0.0
      %v833 = vmax.f32 %v822, 0.0
      %v834 = vmax.f32 %v823, 0.0
      %v835 = vmax.f32 %v824, 0.0
      %v836 = vld [vmem:[%s3] sm:$0xff]
      %v837 = vld [vmem:[%s3 + $0x8] sm:$0xff]
      %v838 = vld [vmem:[%s3 + $0x10] sm:$0xff]
      %v839 = vld [vmem:[%s3 + $0x18] sm:$0xff]
      %v840 = vld [vmem:[%s3 + $0x20] sm:$0xff]
      %v841 = vld [vmem:[%s3 + $0x28] sm:$0xff]
      %v842 = vld [vmem:[%s3 + $0x30] sm:$0xff]
      %v843 = vld [vmem:[%s3 + $0x38] sm:$0xff]
      %v844 = vld [vmem:[%s3 + $0x40] sm:$0xff]
      %v845 = vld [vmem:[%s3 + $0x48] sm:$0xff]
      %v846 = vld [vmem:[%s3 + $0x50] sm:$0xff]
      %v847 = vld [vmem:[%s3 + $0x58] sm:$0xff]
      %v848 = vld [vmem:[%s3 + $0x60] sm:$0xff]
      %v849 = vld [vmem:[%s3 + $0x68] sm:$0xff]
      %v850 = vld [vmem:[%s3 + $0x70] sm:$0xff]
      %v851 = vld [vmem:[%s3 + $0x78] sm:$0xff]
      %v852 = vld [vmem:[%s3 + $0x80] sm:$0xff]
      %v853 = vld [vmem:[%s3 + $0x88] sm:$0xff]
      %v854 = vld [vmem:[%s3 + $0x90] sm:$0xff]
      %v855 = vld [vmem:[%s3 + $0x98] sm:$0xff]
      %v856 = vld [vmem:[%s3 + $0xa0] sm:$0xff]
      %v857 = vld [vmem:[%s3 + $0xa8] sm:$0xff]
      %v858 = vld [vmem:[%s3 + $0xb0] sm:$0xff]
      %v859 = vld [vmem:[%s3 + $0xb8] sm:$0xff]
      %v860 = vld [vmem:[%s3 + $0xc0] sm:$0xff]
      %v861 = vld [vmem:[%s3 + $0xc8] sm:$0xff]
      %v862 = vld [vmem:[%s3 + $0xd0] sm:$0xff]
      %v863 = vld [vmem:[%s3 + $0xd8] sm:$0xff]
      %v864 = vld [vmem:[%s3 + $0xe0] sm:$0xff]
      %v865 = vld [vmem:[%s3 + $0xe8] sm:$0xff]
      %v866 = vld [vmem:[%s3 + $0xf0] sm:$0xff]
      %v867 = vld [vmem:[%s3 + $0xf8] sm:$0xff]
      %v868 = vld [vmem:[%s3 + $0x100] sm:$0xff]
      %v869 = vld [vmem:[%s3 + $0x108] sm:$0xff]
      %v870 = vld [vmem:[%s3 + $0x110] sm:$0xff]
      %v871 = vld [vmem:[%s3 + $0x118] sm:$0xff]
      %v872 = vld [vmem:[%s3 + $0x120] sm:$0xff]
      %v873 = vld [vmem:[%s3 + $0x128] sm:$0xff]
      %v874 = vld [vmem:[%s3 + $0x130] sm:$0xff]
      %v875 = vld [vmem:[%s3 + $0x138] sm:$0xff]
      %v876 = vld [vmem:[%s3 + $0x140] sm:$0xff]
      %v877 = vld [vmem:[%s3 + $0x148] sm:$0xff]
      %v878 = vld [vmem:[%s3 + $0x150] sm:$0xff]
      %v879 = vld [vmem:[%s3 + $0x158] sm:$0xff]
      %v880 = vld [vmem:[%s3 + $0x160] sm:$0xff]
      %v881 = vld [vmem:[%s3 + $0x168] sm:$0xff]
      %v882 = vld [vmem:[%s3 + $0x170] sm:$0xff]
      %v883 = vld [vmem:[%s3 + $0x178] sm:$0xff]
      %884 = vmatpush.msra.mxu0 %v881
      %885 = vmatpush.msra.mxu0 %v878
      %886 = vmatpush.msra.mxu0 %v875
      %887 = vmatpush.msra.mxu0 %v872
      %888 = vmatpush.msra.mxu0 %v869
      %889 = vmatpush.msra.mxu0 %v866
      %890 = vmatpush.msra.mxu0 %v863
      %891 = vmatpush.msra.mxu0 %v860
      %892 = vmatpush.msra.mxu0 %v857
      %893 = vmatpush.msra.mxu0 %v854
      %894 = vmatpush.msra.mxu0 %v851
      %895 = vmatpush.msra.mxu0 %v848
      %896 = vmatpush.msra.mxu0 %v845
      %897 = vmatpush.msra.mxu0 %v842
      %898 = vmatpush.msra.mxu0 %v839
      %899 = vmatpush.msra.mxu0 %v836
      %900 = vmatmul.f32.gmra.mxu0 %v828
      %v901 = vpop.f32.mrf.mxu0
      %v902 = vadd.f32 0.0, %v901
      %903 = vmatmul.f32.gmra.mxu0 %v829
      %v904 = vpop.f32.mrf.mxu0
      %v905 = vadd.f32 0.0, %v904
      %906 = vmatmul.f32.gmra.mxu0 %v830
      %v907 = vpop.f32.mrf.mxu0
      %v908 = vadd.f32 0.0, %v907
      %909 = vmatmul.f32.gmra.mxu0 %v831
      %v910 = vpop.f32.mrf.mxu0
      %v911 = vadd.f32 0.0, %v910
      %912 = vmatmul.f32.gmra.mxu0 %v832
      %v913 = vpop.f32.mrf.mxu0
      %v914 = vadd.f32 0.0, %v913
      %915 = vmatmul.f32.gmra.mxu0 %v833
      %v916 = vpop.f32.mrf.mxu0
      %v917 = vadd.f32 0.0, %v916
      %918 = vmatmul.f32.gmra.mxu0 %v834
      %v919 = vpop.f32.mrf.mxu0
      %v920 = vadd.f32 0.0, %v919
      %921 = vmatmul.f32.gmra.mxu0 %v835
      %v922 = vpop.f32.mrf.mxu0
      %v923 = vadd.f32 0.0, %v922
      %924 = vdwg.mxu0
      %925 = vmatpush.msra.mxu0 %v882
      %926 = vmatpush.msra.mxu0 %v879
      %927 = vmatpush.msra.mxu0 %v876
      %928 = vmatpush.msra.mxu0 %v873
      %929 = vmatpush.msra.mxu0 %v870
      %930 = vmatpush.msra.mxu0 %v867
      %931 = vmatpush.msra.mxu0 %v864
      %932 = vmatpush.msra.mxu0 %v861
      %933 = vmatpush.msra.mxu0 %v858
      %934 = vmatpush.msra.mxu0 %v855
      %935 = vmatpush.msra.mxu0 %v852
      %936 = vmatpush.msra.mxu0 %v849
      %937 = vmatpush.msra.mxu0 %v846
      %938 = vmatpush.msra.mxu0 %v843
      %939 = vmatpush.msra.mxu0 %v840
      %940 = vmatpush.msra.mxu0 %v837
      %941 = vmatmul.f32.gmra.mxu0 %v828
      %v942 = vpop.f32.mrf.mxu0
      %v943 = vadd.f32 0.0, %v942
      %944 = vmatmul.f32.gmra.mxu0 %v829
      %v945 = vpop.f32.mrf.mxu0
      %v946 = vadd.f32 0.0, %v945
      %947 = vmatmul.f32.gmra.mxu0 %v830
      %v948 = vpop.f32.mrf.mxu0
      %v949 = vadd.f32 0.0, %v948
      %950 = vmatmul.f32.gmra.mxu0 %v831
      %v951 = vpop.f32.mrf.mxu0
      %v952 = vadd.f32 0.0, %v951
      %953 = vmatmul.f32.gmra.mxu0 %v832
      %v954 = vpop.f32.mrf.mxu0
      %v955 = vadd.f32 0.0, %v954
      %956 = vmatmul.f32.gmra.mxu0 %v833
      %v957 = vpop.f32.mrf.mxu0
      %v958 = vadd.f32 0.0, %v957
      %959 = vmatmul.f32.gmra.mxu0 %v834
      %v960 = vpop.f32.mrf.mxu0
      %v961 = vadd.f32 0.0, %v960
      %962 = vmatmul.f32.gmra.mxu0 %v835
      %v963 = vpop.f32.mrf.mxu0
      %v964 = vadd.f32 0.0, %v963
      %965 = vdwg.mxu0
      %966 = vmatpush.msra.mxu0 %v883
      %967 = vmatpush.msra.mxu0 %v880
      %968 = vmatpush.msra.mxu0 %v877
      %969 = vmatpush.msra.mxu0 %v874
      %970 = vmatpush.msra.mxu0 %v871
      %971 = vmatpush.msra.mxu0 %v868
      %972 = vmatpush.msra.mxu0 %v865
      %973 = vmatpush.msra.mxu0 %v862
      %974 = vmatpush.msra.mxu0 %v859
      %975 = vmatpush.msra.mxu0 %v856
      %976 = vmatpush.msra.mxu0 %v853
      %977 = vmatpush.msra.mxu0 %v850
      %978 = vmatpush.msra.mxu0 %v847
      %979 = vmatpush.msra.mxu0 %v844
      %980 = vmatpush.msra.mxu0 %v841
      %981 = vmatpush.msra.mxu0 %v838
      %982 = vmatmul.f32.gmra.mxu0 %v828
      %v983 = vpop.f32.mrf.mxu0
      %v984 = vadd.f32 0.0, %v983
      %985 = vmatmul.f32.gmra.mxu0 %v829
      %v986 = vpop.f32.mrf.mxu0
      %v987 = vadd.f32 0.0, %v986
      %988 = vmatmul.f32.gmra.mxu0 %v830
      %v989 = vpop.f32.mrf.mxu0
      %v990 = vadd.f32 0.0, %v989
      %991 = vmatmul.f32.gmra.mxu0 %v831
      %v992 = vpop.f32.mrf.mxu0
      %v993 = vadd.f32 0.0, %v992
      %994 = vmatmul.f32.gmra.mxu0 %v832
      %v995 = vpop.f32.mrf.mxu0
      %v996 = vadd.f32 0.0, %v995
      %997 = vmatmul.f32.gmra.mxu0 %v833
      %v998 = vpop.f32.mrf.mxu0
      %v999 = vadd.f32 0.0, %v998
      %1000 = vmatmul.f32.gmra.mxu0 %v834
      %v1001 = vpop.f32.mrf.mxu0
      %v1002 = vadd.f32 0.0, %v1001
      %1003 = vmatmul.f32.gmra.mxu0 %v835
      %v1004 = vpop.f32.mrf.mxu0
      %v1005 = vadd.f32 0.0, %v1004
      %1006 = vdwg.mxu0
      %1007 = vst [vmem:[#allocation2 + $0x1] sm:$0xff] %v902
      %1008 = vst [vmem:[#allocation2 + $0x9] sm:$0xff] %v905
      %1009 = vst [vmem:[#allocation2 + $0x19] sm:$0xff] %v908
      %1010 = vst [vmem:[#allocation2 + $0x21] sm:$0xff] %v911
      %1011 = vst [vmem:[#allocation2 + $0x31] sm:$0xff] %v914
      %1012 = vst [vmem:[#allocation2 + $0x39] sm:$0xff] %v917
      %1013 = vst [vmem:[#allocation2 + $0x49] sm:$0xff] %v920
      %1014 = vst [vmem:[#allocation2 + $0x51] sm:$0xff] %v923
      %v1015 = vld [vmem:[#allocation2] sm:$0xff]
      %v1016 = vld [vmem:[#allocation2 + $0x8] sm:$0xff]
      %v1017 = vld [vmem:[#allocation2 + $0x18] sm:$0xff]
      %v1018 = vld [vmem:[#allocation2 + $0x20] sm:$0xff]
      %v1019 = vld [vmem:[#allocation2 + $0x30] sm:$0xff]
      %v1020 = vld [vmem:[#allocation2 + $0x38] sm:$0xff]
      %v1021 = vld [vmem:[#allocation2 + $0x48] sm:$0xff]
      %v1022 = vld [vmem:[#allocation2 + $0x50] sm:$0xff]
      %v1023 = vadd.f32 %v943, %v1015
      %v1024 = vadd.f32 %v946, %v1016
      %v1025 = vadd.f32 %v949, %v1017
      %v1026 = vadd.f32 %v952, %v1018
      %v1027 = vadd.f32 %v955, %v1019
      %v1028 = vadd.f32 %v958, %v1020
      %v1029 = vadd.f32 %v961, %v1021
      %v1030 = vadd.f32 %v964, %v1022
      %1031 = vst [vmem:[#allocation2 + $0x1] sm:$0xff] %v984
      %1032 = vst [vmem:[#allocation2 + $0x9] sm:$0xff] %v987
      %1033 = vst [vmem:[#allocation2 + $0x19] sm:$0xff] %v990
      %1034 = vst [vmem:[#allocation2 + $0x21] sm:$0xff] %v993
      %1035 = vst [vmem:[#allocation2 + $0x31] sm:$0xff] %v996
      %1036 = vst [vmem:[#allocation2 + $0x39] sm:$0xff] %v999
      %1037 = vst [vmem:[#allocation2 + $0x49] sm:$0xff] %v1002
      %1038 = vst [vmem:[#allocation2 + $0x51] sm:$0xff] %v1005
      %v1039 = vld [vmem:[#allocation2 + $0x2] sm:$0xff]
      %v1040 = vld [vmem:[#allocation2 + $0xa] sm:$0xff]
      %v1041 = vld [vmem:[#allocation2 + $0x1a] sm:$0xff]
      %v1042 = vld [vmem:[#allocation2 + $0x22] sm:$0xff]
      %v1043 = vld [vmem:[#allocation2 + $0x32] sm:$0xff]
      %v1044 = vld [vmem:[#allocation2 + $0x3a] sm:$0xff]
      %v1045 = vld [vmem:[#allocation2 + $0x4a] sm:$0xff]
      %v1046 = vld [vmem:[#allocation2 + $0x52] sm:$0xff]
      %v1047 = vadd.f32 %v1023, %v1039
      %v1048 = vadd.f32 %v1024, %v1040
      %v1049 = vadd.f32 %v1025, %v1041
      %v1050 = vadd.f32 %v1026, %v1042
      %v1051 = vadd.f32 %v1027, %v1043
      %v1052 = vadd.f32 %v1028, %v1044
      %v1053 = vadd.f32 %v1029, %v1045
      %v1054 = vadd.f32 %v1030, %v1046
      %v1055 = vadd.f32 %v1047, %v826
      %v1056 = vadd.f32 %v1048, %v827
      %v1057 = vadd.f32 %v1049, %v826
      %v1058 = vadd.f32 %v1050, %v827
      %v1059 = vadd.f32 %v1051, %v826
      %v1060 = vadd.f32 %v1052, %v827
      %v1061 = vadd.f32 %v1053, %v826
      %v1062 = vadd.f32 %v1054, %v827
      %v1063 = vadd.f32 %v260, %v501
      %v1064 = vadd.f32 %v261, %v502
      %v1065 = vadd.f32 %v262, %v503
      %v1066 = vadd.f32 %v263, %v504
      %v1067 = vadd.f32 %v264, %v505
      %v1068 = vadd.f32 %v265, %v506
      %v1069 = vadd.f32 %v266, %v507
      %v1070 = vadd.f32 %v267, %v508
      %v1071 = vadd.f32 %v1063, %v579
      %v1072 = vadd.f32 %v1064, %v580
      %v1073 = vadd.f32 %v1065, %v581
      %v1074 = vadd.f32 %v1066, %v582
      %v1075 = vadd.f32 %v1067, %v583
      %v1076 = vadd.f32 %v1068, %v584
      %v1077 = vadd.f32 %v1069, %v585
      %v1078 = vadd.f32 %v1070, %v586
      %v1079 = vadd.f32 %v1071, %v1055
      %v1080 = vadd.f32 %v1072, %v1056
      %v1081 = vadd.f32 %v1073, %v1057
      %v1082 = vadd.f32 %v1074, %v1058
      %v1083 = vadd.f32 %v1075, %v1059
      %v1084 = vadd.f32 %v1076, %v1060
      %v1085 = vadd.f32 %v1077, %v1061
      %v1086 = vadd.f32 %v1078, %v1062
      %1087 = vst [vmem:[%s258] sm:$0xff] %v1079
      %1088 = vst [vmem:[%s258 + $0x8] sm:$0xff] %v1080
      %1089 = vst [vmem:[%s258 + $0x10] sm:$0xff] %v1081
      %1090 = vst [vmem:[%s258 + $0x18] sm:$0xff] %v1082
      %1091 = vst [vmem:[%s258 + $0x20] sm:$0xff] %v1083
      %1092 = vst [vmem:[%s258 + $0x28] sm:$0xff] %v1084
      %1093 = vst [vmem:[%s258 + $0x30] sm:$0xff] %v1085
      %1094 = vst [vmem:[%s258 + $0x38] sm:$0xff] %v1086
      %s1095 = smul.u32 4, %s17
      %p1096 = scmp.lt.s32.totalorder %s1095, 7
      %s1097 = scalar_select %p1096, %s1095, 7
      %s1098 = smul.addr %s1097, 2
      %s1099 = smul.addr %s1098, 8
      %s1100 = scalar_lea.vmem %s6, %s1099
      // Predicated region
      $region45: #{mixed_op_forward.1} parent=43 // pred_check
        %p1101 = pneg %p166
      $region46: #{mixed_op_forward.1} parent=43 // pred_check_branch
        %1103 = sbr.rel (%p1101) target = $region48
      $region47: #{mixed_op_forward.1} parent=43 // pred_region
        %s1104 = smul.u32 4, %s17
      $region48: #{mixed_op_forward.1} parent=43 // pred_fallthru
        _
    $region44: #{mixed_op_forward.1} parent=5 // pred_fallthru
      _
    %p1105 = scmp.le.s32.totalorder 2, %s12
    // Predicated region
    $region49: #{mixed_op_forward.1} parent=5 // pred_check
      %p1106 = pneg %p1105
    $region50: #{mixed_op_forward.1} parent=5 // pred_check_branch
      %1108 = sbr.rel (%p1106) target = $region52
    $region51: #{mixed_op_forward.1} parent=5 // pred_region
      %s1109 = ssub.s32 %s12, 2
      // Predicated region
      $region53: #{mixed_op_forward.1} parent=51 // pred_check
        %p1110 = pneg %p172
      $region54: #{mixed_op_forward.1} parent=51 // pred_check_branch
        %1112 = sbr.rel (%p1110) target = $region56
      $region55: #{mixed_op_forward.1} parent=51 // pred_region
        %s1113 = smul.u32 4, %s18
        %p1114 = scmp.lt.s32.totalorder %s1113, 7
        %s1115 = scalar_select %p1114, %s1113, 7
        %s1116 = smul.addr %s1115, 2
        %s1117 = smul.addr %s1116, 8
        %s1118 = scalar_lea.vmem %s6, %s1117
      $region56: #{mixed_op_forward.1} parent=51 // pred_fallthru
        _
    $region52: #{mixed_op_forward.1} parent=5 // pred_fallthru
      _
  $region6: #{mixed_op_forward.1} parent=0 // loop_footer
    %s16 = sadd.s32 1, %s12
  $region7: #{mixed_op_forward.1} parent=0 // loop_footer_branch
    %11 = sbr.rel target = $region3
  $region8: #{mixed_op_forward.1} parent=0 // loop_exit
    _

</llo_original>
